<compile_context>
chip_gen: v6e
topology: v6e:2x2x1
jax: 0.10.0
libtpu: 0.0.40
codegen_flags: <defaults>
</compile_context>

<pallas_src>
import jax
import jax.numpy as jnp
from jax.experimental import pallas as pl
from jax.experimental.pallas import tpu as pltpu

# ---- logical problem sizes (fixed by the PyTorch module) ----
OBS_DIM = 24
Z_DIM = 8
CODE_DIM = 16
HIDDEN = 150
IN_DIM = OBS_DIM + Z_DIM          # 32

# ---- lane-dense padded sizes ----
HID_P = 256                       # padded hidden width (150 -> 256)
OUT_P = 128                       # fused head/output width

# column layout inside the fused 128-lane head/output tile
#   cols  0:32  -> obs_distr_params (decoder output)
#   cols 32:48  -> mu
#   cols 48:64  -> logvar
#   cols 64:80  -> stds  (= exp(0.5*logvar); logvar weights duplicated into these cols)
MU_LO, MU_HI = 32, 48
LV_LO, LV_HI = 48, 64
SD_LO, SD_HI = 64, 80

DEFAULT_TB = 512                  # batch-tile rows (fills the 256-row MXU on v6e/v7x)
MIN_SPLIT_ROWS = 128              # split into >=2 tiles once each tile would get >=128 rows


def _round_up(x, m):
    return ((x + m - 1) // m) * m


def _choose_tb(batch, tb_max):
    """Adaptive batch tile: shrink for small batches, split >=2 tiles when big enough."""
    b8 = _round_up(batch, 8)
    if b8 <= tb_max:
        if b8 >= 2 * MIN_SPLIT_ROWS:
            return _round_up((b8 + 1) // 2, 8)   # 2 tiles -> both v7x TensorCores used
        return b8
    return tb_max


def vae_kernel(x_ref, eps_ref,
               w1_ref, b1_ref, w2_ref, b2_ref,
               wh_ref, bh_ref, sel_ref,
               wd1_ref, bd1_ref, wd2_ref, bd2_ref, wd3_ref, bd3_ref,
               out_ref):
    bf16 = jnp.bfloat16
    x = x_ref[...].astype(bf16)                                     # [TB, 32]
    eps = eps_ref[...]                                              # [TB, 128] (eps at LV cols)

    # ---- encoder: Linear -> ReLU -> Linear -> ReLU (bf16 matmuls, f32 accum/activations) ----
    h = jnp.dot(x, w1_ref[...], preferred_element_type=jnp.float32) + b1_ref[...]
    h = jnp.maximum(h, 0.0)
    h = jnp.dot(h.astype(bf16), w2_ref[...], preferred_element_type=jnp.float32) + b2_ref[...]
    h = jnp.maximum(h, 0.0)                                         # [TB, 256]

    # ---- fused heads: one matmul produces mu | logvar | logvar(dup for stds) ----
    heads = jnp.dot(h.astype(bf16), wh_ref[...], preferred_element_type=jnp.float32) + bh_ref[...]
    stds_full = jnp.exp(0.5 * heads)                                # stds live in LV and SD cols

    sel = sel_ref[...]                                              # [8, 128] f32 selector table
    mu_sel = sel[0:1, :]                                            # 1 on mu cols
    stats_sel = sel[1:2, :]                                         # 1 on mu|logvar cols
    sd_sel = sel[2:3, :]                                            # 1 on stds cols

    # ---- reparameterization, kept in the fused lane layout ----
    # dec_in: cols MU = mu, cols LV = eps * stds, everything else 0 (eps is zero off LV cols).
    # wd1 rows are duplicated into both the MU and LV row-slots, so
    # dec_in @ wd1_p == (mu + eps*stds) @ wd1 == code @ wd1.
    dec_in = (heads * mu_sel + eps * stds_full).astype(bf16)        # [TB, 128]

    # ---- decoder: Linear -> ReLU -> Linear -> ReLU -> Linear ----
    d = jnp.dot(dec_in, wd1_ref[...], preferred_element_type=jnp.float32) + bd1_ref[...]
    d = jnp.maximum(d, 0.0)
    d = jnp.dot(d.astype(bf16), wd2_ref[...], preferred_element_type=jnp.float32) + bd2_ref[...]
    d = jnp.maximum(d, 0.0)
    dec_out = jnp.dot(d.astype(bf16), wd3_ref[...], preferred_element_type=jnp.float32) + bd3_ref[...]

    # ---- single lane-dense fused store: out | mu | logvar | stds | pad ----
    out_ref[...] = dec_out + heads * stats_sel + stds_full * sd_sel


def init_params(key):
    """Deterministic parameter init. Weights stored as [in, out]; biases as [1, out]."""
    def linear(k, fan_in, fan_out):
        kw, kb = jax.random.split(k)
        scale = 1.0 / jnp.sqrt(jnp.float32(fan_in))
        w = jax.random.uniform(kw, (fan_in, fan_out), jnp.float32, -scale, scale)
        b = jax.random.uniform(kb, (1, fan_out), jnp.float32, -scale, scale)
        return w, b

    keys = jax.random.split(key, 7)
    w1, b1 = linear(keys[0], IN_DIM, HIDDEN)
    w2, b2 = linear(keys[1], HIDDEN, HIDDEN)
    wmu, bmu = linear(keys[2], HIDDEN, CODE_DIM)
    wlv, blv = linear(keys[3], HIDDEN, CODE_DIM)
    wd1, bd1 = linear(keys[4], CODE_DIM, HIDDEN)
    wd2, bd2 = linear(keys[5], HIDDEN, HIDDEN)
    wd3, bd3 = linear(keys[6], HIDDEN, IN_DIM)
    return (w1, b1, w2, b2, wmu, bmu, wlv, blv, wd1, bd1, wd2, bd2, wd3, bd3)


def pack_params(params):
    """One-time packing into lane-dense, fused, zero-padded kernel weights (weights bf16)."""
    (w1, b1, w2, b2, wmu, bmu, wlv, blv, wd1, bd1, wd2, bd2, wd3, bd3) = params
    f32, bf16 = jnp.float32, jnp.bfloat16

    def pad_to(a, shape, dtype):
        out = jnp.zeros(shape, f32)
        out = out.at[tuple(slice(0, s) for s in a.shape)].set(a.astype(f32))
        return out.astype(dtype)

    # no 32->128 padding of the input feature dim anymore
    w1_p = pad_to(w1, (IN_DIM, HID_P), bf16)
    b1_p = pad_to(b1.reshape(1, -1), (1, HID_P), f32)
    w2_p = pad_to(w2, (HID_P, HID_P), bf16)
    b2_p = pad_to(b2.reshape(1, -1), (1, HID_P), f32)

    # fused head weight: mu cols, logvar cols, and a duplicate of logvar for the stds slot
    wh = jnp.zeros((HID_P, OUT_P), f32)
    wh = wh.at[:HIDDEN, MU_LO:MU_LO + CODE_DIM].set(wmu.astype(f32))
    wh = wh.at[:HIDDEN, LV_LO:LV_LO + CODE_DIM].set(wlv.astype(f32))
    wh = wh.at[:HIDDEN, SD_LO:SD_LO + CODE_DIM].set(wlv.astype(f32))
    wh_p = wh.astype(bf16)
    bh_p = jnp.zeros((1, OUT_P), f32)
    bh_p = bh_p.at[0, MU_LO:MU_LO + CODE_DIM].set(bmu.reshape(-1).astype(f32))
    bh_p = bh_p.at[0, LV_LO:LV_LO + CODE_DIM].set(blv.reshape(-1).astype(f32))
    bh_p = bh_p.at[0, SD_LO:SD_LO + CODE_DIM].set(blv.reshape(-1).astype(f32))

    # selector table (replaces in-kernel iota masks): row0=mu cols, row1=mu|logvar, row2=stds
    sel_p = jnp.zeros((8, OUT_P), f32)
    sel_p = sel_p.at[0, MU_LO:MU_HI].set(1.0)
    sel_p = sel_p.at[1, MU_LO:LV_HI].set(1.0)
    sel_p = sel_p.at[2, SD_LO:SD_HI].set(1.0)

    # decoder first layer: same wd1 placed on both the MU rows (mu) and LV rows (eps*stds)
    wd1_f = jnp.zeros((OUT_P, HID_P), f32)
    wd1_f = wd1_f.at[MU_LO:MU_LO + CODE_DIM, :HIDDEN].set(wd1.astype(f32))
    wd1_f = wd1_f.at[LV_LO:LV_LO + CODE_DIM, :HIDDEN].set(wd1.astype(f32))
    wd1_p = wd1_f.astype(bf16)
    bd1_p = pad_to(bd1.reshape(1, -1), (1, HID_P), f32)

    wd2_p = pad_to(wd2, (HID_P, HID_P), bf16)
    bd2_p = pad_to(bd2.reshape(1, -1), (1, HID_P), f32)
    wd3_p = pad_to(wd3, (HID_P, OUT_P), bf16)
    bd3_p = pad_to(bd3.reshape(1, -1), (1, OUT_P), f32)

    return (w1_p, b1_p, w2_p, b2_p, wh_p, bh_p, sel_p,
            wd1_p, bd1_p, wd2_p, bd2_p, wd3_p, bd3_p)


def vae_forward(obs_z, epsilon, packed_params, *, tb_max=DEFAULT_TB):
    """Returns (obs_distr_params, (mu, logvar, stds)) exactly like VAE.forward."""
    (w1_p, b1_p, w2_p, b2_p, wh_p, bh_p, sel_p,
     wd1_p, bd1_p, wd2_p, bd2_p, wd3_p, bd3_p) = packed_params

    B = obs_z.shape[0]
    tb = _choose_tb(B, tb_max)
    b_pad = _round_up(B, tb)
    grid = (b_pad // tb,)

    # x stays at its natural 32-lane width (full-array last dim is legal for BlockSpec);
    # epsilon is placed on the logvar columns so eps * exp(0.5*heads) = eps*stds in-place.
    if b_pad == B:
        x_p = obs_z.astype(jnp.float32)
    else:
        x_p = jnp.zeros((b_pad, IN_DIM), jnp.float32).at[:B, :].set(obs_z.astype(jnp.float32))
    eps_p = jnp.zeros((b_pad, OUT_P), jnp.float32).at[:B, LV_LO:LV_LO + CODE_DIM].set(
        epsilon.astype(jnp.float32))

    def weight_spec(a):
        # full-array block, constant block index -> stays VMEM-resident across grid steps
        return pl.BlockSpec(a.shape, lambda i: (0, 0))

    weights = (w1_p, b1_p, w2_p, b2_p, wh_p, bh_p, sel_p,
               wd1_p, bd1_p, wd2_p, bd2_p, wd3_p, bd3_p)

    flops = 2 * b_pad * (IN_DIM * HID_P + HID_P * HID_P + HID_P * OUT_P
                         + OUT_P * HID_P + HID_P * HID_P + HID_P * OUT_P)
    weight_bytes = sum(int(w.size) * w.dtype.itemsize for w in weights)
    bytes_accessed = weight_bytes + 4 * b_pad * (IN_DIM + OUT_P + OUT_P)

    fused = pl.pallas_call(
        vae_kernel,
        out_shape=jax.ShapeDtypeStruct((b_pad, OUT_P), jnp.float32),
        grid=grid,
        in_specs=[
            pl.BlockSpec((tb, IN_DIM), lambda i: (i, 0)),     # obs_z tile (natural 32 lanes)
            pl.BlockSpec((tb, OUT_P), lambda i: (i, 0)),      # epsilon tile
        ] + [weight_spec(w) for w in weights],
        out_specs=pl.BlockSpec((tb, OUT_P), lambda i: (i, 0)),
        compiler_params=pltpu.CompilerParams(dimension_semantics=("parallel",)),
        cost_estimate=pl.CostEstimate(flops=flops,
                                      transcendentals=b_pad * OUT_P,
                                      bytes_accessed=bytes_accessed),
    )(x_p, eps_p, *weights)

    obs_distr_params = fused[:B, :IN_DIM]
    mu = fused[:B, MU_LO:MU_HI]
    logvar = fused[:B, LV_LO:LV_HI]
    stds = fused[:B, SD_LO:SD_HI]
    return obs_distr_params, (mu, logvar, stds)


def vae_forward_ref(obs_z, epsilon, params):
    """Plain-JAX f32 reference mirroring the PyTorch forward."""
    (w1, b1, w2, b2, wmu, bmu, wlv, blv, wd1, bd1, wd2, bd2, wd3, bd3) = params
    h = jnp.maximum(obs_z @ w1 + b1, 0.0)
    h = jnp.maximum(h @ w2 + b2, 0.0)
    mu = h @ wmu + bmu
    logvar = h @ wlv + blv
    stds = jnp.exp(0.5 * logvar)
    code = epsilon * stds + mu
    d = jnp.maximum(code @ wd1 + bd1, 0.0)
    d = jnp.maximum(d @ wd2 + bd2, 0.0)
    out = d @ wd3 + bd3
    return out, (mu, logvar, stds)


if __name__ == "__main__":
    key = jax.random.PRNGKey(0)
    k_obs, k_eps, k_params, k_obs2, k_eps2 = jax.random.split(key, 5)

    params = init_params(k_params)
    packed = pack_params(params)

    # matmul operands are bf16 (f32 accumulation) -> loosened tolerances vs. the f32 reference
    TOL = dict(atol=3e-2, rtol=3e-2)

    # ---- small batch (module-consistent shapes); adaptive tb shrinks the tile to 8 rows ----
    B1 = 8
    obs_z = jax.random.normal(k_obs, (B1, IN_DIM), jnp.float32)
    epsilon = jax.random.normal(k_eps, (B1, CODE_DIM), jnp.float32)

    out, (mu, logvar, stds) = vae_forward(obs_z, epsilon, packed)
    jax.block_until_ready((out, mu, logvar, stds))

    r_out, (r_mu, r_lv, r_sd) = vae_forward_ref(obs_z, epsilon, params)
    assert jnp.allclose(out, r_out, **TOL)
    assert jnp.allclose(mu, r_mu, **TOL)
    assert jnp.allclose(logvar, r_lv, **TOL)
    assert jnp.allclose(stds, r_sd, **TOL)

    # ---- larger batch exercising the multi-tile parallel grid (2 tiles + ragged padding) ----
    B2 = 300
    obs_z2 = jax.random.normal(k_obs2, (B2, IN_DIM), jnp.float32)
    epsilon2 = jax.random.normal(k_eps2, (B2, CODE_DIM), jnp.float32)

    out2, (mu2, lv2, sd2) = vae_forward(obs_z2, epsilon2, packed)
    jax.block_until_ready((out2, mu2, lv2, sd2))

    r_out2, (r_mu2, r_lv2, r_sd2) = vae_forward_ref(obs_z2, epsilon2, params)
    assert jnp.allclose(out2, r_out2, **TOL)
    assert jnp.allclose(mu2, r_mu2, **TOL)
    assert jnp.allclose(lv2, r_lv2, **TOL)
    assert jnp.allclose(sd2, r_sd2, **TOL)

    print("KERNEL_OK")
</pallas_src>

<mosaic_0001>
module attributes {stable_mosaic.version = 11 : i64} {
  func.func @vae_kernel(%arg0: i32, %arg1: memref<8x32xf32, #tpu.memory_space<vmem>>, %arg2: memref<8x128xf32, #tpu.memory_space<vmem>>, %arg3: memref<32x256xbf16, #tpu.memory_space<vmem>>, %arg4: memref<1x256xf32, #tpu.memory_space<vmem>>, %arg5: memref<256x256xbf16, #tpu.memory_space<vmem>>, %arg6: memref<1x256xf32, #tpu.memory_space<vmem>>, %arg7: memref<256x128xbf16, #tpu.memory_space<vmem>>, %arg8: memref<1x128xf32, #tpu.memory_space<vmem>>, %arg9: memref<8x128xf32, #tpu.memory_space<vmem>>, %arg10: memref<128x256xbf16, #tpu.memory_space<vmem>>, %arg11: memref<1x256xf32, #tpu.memory_space<vmem>>, %arg12: memref<256x256xbf16, #tpu.memory_space<vmem>>, %arg13: memref<1x256xf32, #tpu.memory_space<vmem>>, %arg14: memref<256x128xbf16, #tpu.memory_space<vmem>>, %arg15: memref<1x128xf32, #tpu.memory_space<vmem>>, %arg16: memref<8x128xf32, #tpu.memory_space<vmem>>) attributes {dimension_semantics = [#tpu.dimension_semantics<parallel>], iteration_bounds = array<i64: 1>, scalar_prefetch = 0 : i64, scratch_operands = 0 : i64, tpu.core_type = #tpu.core_type<tc>, window_params = [{transform_indices = @transform_0, window_bounds = array<i64: 8, 32>}, {transform_indices = @transform_1, window_bounds = array<i64: 8, 128>}, {pipeline_mode = #tpu.pipeline_mode<synchronous>, transform_indices = @transform_2, window_bounds = array<i64: 32, 256>}, {pipeline_mode = #tpu.pipeline_mode<synchronous>, transform_indices = @transform_3, window_bounds = array<i64: 1, 256>}, {pipeline_mode = #tpu.pipeline_mode<synchronous>, transform_indices = @transform_4, window_bounds = array<i64: 256, 256>}, {pipeline_mode = #tpu.pipeline_mode<synchronous>, transform_indices = @transform_5, window_bounds = array<i64: 1, 256>}, {pipeline_mode = #tpu.pipeline_mode<synchronous>, transform_indices = @transform_6, window_bounds = array<i64: 256, 128>}, {pipeline_mode = #tpu.pipeline_mode<synchronous>, transform_indices = @transform_7, window_bounds = array<i64: 1, 128>}, {pipeline_mode = #tpu.pipeline_mode<synchronous>, transform_indices = @transform_8, window_bounds = array<i64: 8, 128>}, {pipeline_mode = #tpu.pipeline_mode<synchronous>, transform_indices = @transform_9, window_bounds = array<i64: 128, 256>}, {pipeline_mode = #tpu.pipeline_mode<synchronous>, transform_indices = @transform_10, window_bounds = array<i64: 1, 256>}, {pipeline_mode = #tpu.pipeline_mode<synchronous>, transform_indices = @transform_11, window_bounds = array<i64: 256, 256>}, {pipeline_mode = #tpu.pipeline_mode<synchronous>, transform_indices = @transform_12, window_bounds = array<i64: 1, 256>}, {pipeline_mode = #tpu.pipeline_mode<synchronous>, transform_indices = @transform_13, window_bounds = array<i64: 256, 128>}, {pipeline_mode = #tpu.pipeline_mode<synchronous>, transform_indices = @transform_14, window_bounds = array<i64: 1, 128>}, {transform_indices = @transform_15, window_bounds = array<i64: 8, 128>}]} {
    %c0 = arith.constant 0 : index
    %c0_0 = arith.constant 0 : index
    %0 = vector.load %arg1[%c0, %c0_0] : memref<8x32xf32, #tpu.memory_space<vmem>>, vector<8x32xf32>
    %1 = arith.truncf %0 : vector<8x32xf32> to vector<8x32xbf16>
    %c0_1 = arith.constant 0 : index
    %c0_2 = arith.constant 0 : index
    %2 = vector.load %arg2[%c0_1, %c0_2] : memref<8x128xf32, #tpu.memory_space<vmem>>, vector<8x128xf32>
    %c0_3 = arith.constant 0 : index
    %c0_4 = arith.constant 0 : index
    %3 = vector.load %arg3[%c0_3, %c0_4] : memref<32x256xbf16, #tpu.memory_space<vmem>>, vector<32x256xbf16>
    %cst = arith.constant dense<0.000000e+00> : vector<8x256xf32>
    %4 = tpu.matmul %1, %3, %cst {dimension_numbers = #tpu.dot_dimension_numbers<[1], [0], [0], [1], [0, 0, 1, 1], [], []>} : vector<8x32xbf16>, vector<32x256xbf16>, vector<8x256xf32> -> vector<8x256xf32>
    %c0_5 = arith.constant 0 : index
    %c0_6 = arith.constant 0 : index
    %5 = vector.load %arg4[%c0_5, %c0_6] : memref<1x256xf32, #tpu.memory_space<vmem>>, vector<1x256xf32>
    %6 = vector.broadcast %5 : vector<1x256xf32> to vector<8x256xf32>
    %7 = arith.addf %4, %6 : vector<8x256xf32>
    %cst_7 = arith.constant 0.000000e+00 : f32
    %8 = vector.broadcast %cst_7 : f32 to vector<8x256xf32>
    %9 = arith.maximumf %7, %8 : vector<8x256xf32>
    %10 = arith.truncf %9 : vector<8x256xf32> to vector<8x256xbf16>
    %c0_8 = arith.constant 0 : index
    %c0_9 = arith.constant 0 : index
    %11 = vector.load %arg5[%c0_8, %c0_9] : memref<256x256xbf16, #tpu.memory_space<vmem>>, vector<256x256xbf16>
    %cst_10 = arith.constant dense<0.000000e+00> : vector<8x256xf32>
    %12 = tpu.matmul %10, %11, %cst_10 {dimension_numbers = #tpu.dot_dimension_numbers<[1], [0], [0], [1], [0, 0, 1, 1], [], []>} : vector<8x256xbf16>, vector<256x256xbf16>, vector<8x256xf32> -> vector<8x256xf32>
    %c0_11 = arith.constant 0 : index
    %c0_12 = arith.constant 0 : index
    %13 = vector.load %arg6[%c0_11, %c0_12] : memref<1x256xf32, #tpu.memory_space<vmem>>, vector<1x256xf32>
    %14 = vector.broadcast %13 : vector<1x256xf32> to vector<8x256xf32>
    %15 = arith.addf %12, %14 : vector<8x256xf32>
    %cst_13 = arith.constant 0.000000e+00 : f32
    %16 = vector.broadcast %cst_13 : f32 to vector<8x256xf32>
    %17 = arith.maximumf %15, %16 : vector<8x256xf32>
    %18 = arith.truncf %17 : vector<8x256xf32> to vector<8x256xbf16>
    %c0_14 = arith.constant 0 : index
    %c0_15 = arith.constant 0 : index
    %19 = vector.load %arg7[%c0_14, %c0_15] : memref<256x128xbf16, #tpu.memory_space<vmem>>, vector<256x128xbf16>
    %cst_16 = arith.constant dense<0.000000e+00> : vector<8x128xf32>
    %20 = tpu.matmul %18, %19, %cst_16 {dimension_numbers = #tpu.dot_dimension_numbers<[1], [0], [0], [1], [0, 0, 1, 1], [], []>} : vector<8x256xbf16>, vector<256x128xbf16>, vector<8x128xf32> -> vector<8x128xf32>
    %c0_17 = arith.constant 0 : index
    %c0_18 = arith.constant 0 : index
    %21 = vector.load %arg8[%c0_17, %c0_18] : memref<1x128xf32, #tpu.memory_space<vmem>>, vector<1x128xf32>
    %22 = vector.broadcast %21 : vector<1x128xf32> to vector<8x128xf32>
    %23 = arith.addf %20, %22 : vector<8x128xf32>
    %cst_19 = arith.constant 5.000000e-01 : f32
    %24 = vector.broadcast %cst_19 : f32 to vector<8x128xf32>
    %25 = arith.mulf %24, %23 : vector<8x128xf32>
    %26 = math.exp %25 : vector<8x128xf32>
    %c0_20 = arith.constant 0 : index
    %c0_21 = arith.constant 0 : index
    %27 = vector.load %arg9[%c0_20, %c0_21] : memref<8x128xf32, #tpu.memory_space<vmem>>, vector<8x128xf32>
    %28 = vector.extract_strided_slice %27 {offsets = [0, 0], sizes = [1, 128], strides = [1, 1]} : vector<8x128xf32> to vector<1x128xf32>
    %29 = vector.extract_strided_slice %27 {offsets = [1, 0], sizes = [1, 128], strides = [1, 1]} : vector<8x128xf32> to vector<1x128xf32>
    %30 = vector.extract_strided_slice %27 {offsets = [2, 0], sizes = [1, 128], strides = [1, 1]} : vector<8x128xf32> to vector<1x128xf32>
    %31 = vector.broadcast %28 : vector<1x128xf32> to vector<8x128xf32>
    %32 = arith.mulf %23, %31 : vector<8x128xf32>
    %33 = arith.mulf %2, %26 : vector<8x128xf32>
    %34 = arith.addf %32, %33 : vector<8x128xf32>
    %35 = arith.truncf %34 : vector<8x128xf32> to vector<8x128xbf16>
    %c0_22 = arith.constant 0 : index
    %c0_23 = arith.constant 0 : index
    %36 = vector.load %arg10[%c0_22, %c0_23] : memref<128x256xbf16, #tpu.memory_space<vmem>>, vector<128x256xbf16>
    %cst_24 = arith.constant dense<0.000000e+00> : vector<8x256xf32>
    %37 = tpu.matmul %35, %36, %cst_24 {dimension_numbers = #tpu.dot_dimension_numbers<[1], [0], [0], [1], [0, 0, 1, 1], [], []>} : vector<8x128xbf16>, vector<128x256xbf16>, vector<8x256xf32> -> vector<8x256xf32>
    %c0_25 = arith.constant 0 : index
    %c0_26 = arith.constant 0 : index
    %38 = vector.load %arg11[%c0_25, %c0_26] : memref<1x256xf32, #tpu.memory_space<vmem>>, vector<1x256xf32>
    %39 = vector.broadcast %38 : vector<1x256xf32> to vector<8x256xf32>
    %40 = arith.addf %37, %39 : vector<8x256xf32>
    %cst_27 = arith.constant 0.000000e+00 : f32
    %41 = vector.broadcast %cst_27 : f32 to vector<8x256xf32>
    %42 = arith.maximumf %40, %41 : vector<8x256xf32>
    %43 = arith.truncf %42 : vector<8x256xf32> to vector<8x256xbf16>
    %c0_28 = arith.constant 0 : index
    %c0_29 = arith.constant 0 : index
    %44 = vector.load %arg12[%c0_28, %c0_29] : memref<256x256xbf16, #tpu.memory_space<vmem>>, vector<256x256xbf16>
    %cst_30 = arith.constant dense<0.000000e+00> : vector<8x256xf32>
    %45 = tpu.matmul %43, %44, %cst_30 {dimension_numbers = #tpu.dot_dimension_numbers<[1], [0], [0], [1], [0, 0, 1, 1], [], []>} : vector<8x256xbf16>, vector<256x256xbf16>, vector<8x256xf32> -> vector<8x256xf32>
    %c0_31 = arith.constant 0 : index
    %c0_32 = arith.constant 0 : index
    %46 = vector.load %arg13[%c0_31, %c0_32] : memref<1x256xf32, #tpu.memory_space<vmem>>, vector<1x256xf32>
    %47 = vector.broadcast %46 : vector<1x256xf32> to vector<8x256xf32>
    %48 = arith.addf %45, %47 : vector<8x256xf32>
    %cst_33 = arith.constant 0.000000e+00 : f32
    %49 = vector.broadcast %cst_33 : f32 to vector<8x256xf32>
    %50 = arith.maximumf %48, %49 : vector<8x256xf32>
    %51 = arith.truncf %50 : vector<8x256xf32> to vector<8x256xbf16>
    %c0_34 = arith.constant 0 : index
    %c0_35 = arith.constant 0 : index
    %52 = vector.load %arg14[%c0_34, %c0_35] : memref<256x128xbf16, #tpu.memory_space<vmem>>, vector<256x128xbf16>
    %cst_36 = arith.constant dense<0.000000e+00> : vector<8x128xf32>
    %53 = tpu.matmul %51, %52, %cst_36 {dimension_numbers = #tpu.dot_dimension_numbers<[1], [0], [0], [1], [0, 0, 1, 1], [], []>} : vector<8x256xbf16>, vector<256x128xbf16>, vector<8x128xf32> -> vector<8x128xf32>
    %c0_37 = arith.constant 0 : index
    %c0_38 = arith.constant 0 : index
    %54 = vector.load %arg15[%c0_37, %c0_38] : memref<1x128xf32, #tpu.memory_space<vmem>>, vector<1x128xf32>
    %55 = vector.broadcast %54 : vector<1x128xf32> to vector<8x128xf32>
    %56 = arith.addf %53, %55 : vector<8x128xf32>
    %57 = vector.broadcast %29 : vector<1x128xf32> to vector<8x128xf32>
    %58 = arith.mulf %23, %57 : vector<8x128xf32>
    %59 = arith.addf %56, %58 : vector<8x128xf32>
    %60 = vector.broadcast %30 : vector<1x128xf32> to vector<8x128xf32>
    %61 = arith.mulf %26, %60 : vector<8x128xf32>
    %62 = arith.addf %59, %61 : vector<8x128xf32>
    %c0_39 = arith.constant 0 : index
    %c0_40 = arith.constant 0 : index
    %63 = vector.load %arg16[%c0_39, %c0_40] : memref<8x128xf32, #tpu.memory_space<vmem>>, vector<8x128xf32>
    tpu.vector_store %arg16[%c0_39, %c0_40], %62 {strides = array<i32>} : memref<8x128xf32, #tpu.memory_space<vmem>>, vector<8x128xf32>,
    return
  }
  func.func @transform_0(%arg0: i32) -> (i32, i32) {
    %c0_i32 = arith.constant 0 : i32
    %c0_i32_0 = arith.constant 0 : i32
    return %arg0, %c0_i32 : i32, i32
  }
  func.func @transform_1(%arg0: i32) -> (i32, i32) {
    %c0_i32 = arith.constant 0 : i32
    %c0_i32_0 = arith.constant 0 : i32
    return %arg0, %c0_i32 : i32, i32
  }
  func.func @transform_2(%arg0: i32) -> (i32, i32) {
    %c0_i32 = arith.constant 0 : i32
    %c0_i32_0 = arith.constant 0 : i32
    %c0_i32_1 = arith.constant 0 : i32
    return %c0_i32, %c0_i32_0 : i32, i32
  }
  func.func @transform_3(%arg0: i32) -> (i32, i32) {
    %c0_i32 = arith.constant 0 : i32
    %c0_i32_0 = arith.constant 0 : i32
    %c0_i32_1 = arith.constant 0 : i32
    return %c0_i32, %c0_i32_0 : i32, i32
  }
  func.func @transform_4(%arg0: i32) -> (i32, i32) {
    %c0_i32 = arith.constant 0 : i32
    %c0_i32_0 = arith.constant 0 : i32
    %c0_i32_1 = arith.constant 0 : i32
    return %c0_i32, %c0_i32_0 : i32, i32
  }
  func.func @transform_5(%arg0: i32) -> (i32, i32) {
    %c0_i32 = arith.constant 0 : i32
    %c0_i32_0 = arith.constant 0 : i32
    %c0_i32_1 = arith.constant 0 : i32
    return %c0_i32, %c0_i32_0 : i32, i32
  }
  func.func @transform_6(%arg0: i32) -> (i32, i32) {
    %c0_i32 = arith.constant 0 : i32
    %c0_i32_0 = arith.constant 0 : i32
    %c0_i32_1 = arith.constant 0 : i32
    return %c0_i32, %c0_i32_0 : i32, i32
  }
  func.func @transform_7(%arg0: i32) -> (i32, i32) {
    %c0_i32 = arith.constant 0 : i32
    %c0_i32_0 = arith.constant 0 : i32
    %c0_i32_1 = arith.constant 0 : i32
    return %c0_i32, %c0_i32_0 : i32, i32
  }
  func.func @transform_8(%arg0: i32) -> (i32, i32) {
    %c0_i32 = arith.constant 0 : i32
    %c0_i32_0 = arith.constant 0 : i32
    %c0_i32_1 = arith.constant 0 : i32
    return %c0_i32, %c0_i32_0 : i32, i32
  }
  func.func @transform_9(%arg0: i32) -> (i32, i32) {
    %c0_i32 = arith.constant 0 : i32
    %c0_i32_0 = arith.constant 0 : i32
    %c0_i32_1 = arith.constant 0 : i32
    return %c0_i32, %c0_i32_0 : i32, i32
  }
  func.func @transform_10(%arg0: i32) -> (i32, i32) {
    %c0_i32 = arith.constant 0 : i32
    %c0_i32_0 = arith.constant 0 : i32
    %c0_i32_1 = arith.constant 0 : i32
    return %c0_i32, %c0_i32_0 : i32, i32
  }
  func.func @transform_11(%arg0: i32) -> (i32, i32) {
    %c0_i32 = arith.constant 0 : i32
    %c0_i32_0 = arith.constant 0 : i32
    %c0_i32_1 = arith.constant 0 : i32
    return %c0_i32, %c0_i32_0 : i32, i32
  }
  func.func @transform_12(%arg0: i32) -> (i32, i32) {
    %c0_i32 = arith.constant 0 : i32
    %c0_i32_0 = arith.constant 0 : i32
    %c0_i32_1 = arith.constant 0 : i32
    return %c0_i32, %c0_i32_0 : i32, i32
  }
  func.func @transform_13(%arg0: i32) -> (i32, i32) {
    %c0_i32 = arith.constant 0 : i32
    %c0_i32_0 = arith.constant 0 : i32
    %c0_i32_1 = arith.constant 0 : i32
    return %c0_i32, %c0_i32_0 : i32, i32
  }
  func.func @transform_14(%arg0: i32) -> (i32, i32) {
    %c0_i32 = arith.constant 0 : i32
    %c0_i32_0 = arith.constant 0 : i32
    %c0_i32_1 = arith.constant 0 : i32
    return %c0_i32, %c0_i32_0 : i32, i32
  }
  func.func @transform_15(%arg0: i32) -> (i32, i32) {
    %c0_i32 = arith.constant 0 : i32
    %c0_i32_0 = arith.constant 0 : i32
    return %arg0, %c0_i32 : i32, i32
  }
}

</mosaic_0001>

<llo_original>
// kernel: tpu_custom_call.1
$region0: #{tpu_custom_call.1}
  #allocation0 [shape = 'u32[]', space=smem, size = 0x4, offset = 0x4, fixed_abs, tag = 'smem constant byte address 0x4 - core index']
  #allocation1 [shape = 'u32[144,128]{1,0:T(1,128)}', space=vmem, size = 0x12000, scoped, tag = 'internal scratch']
  %s0 = inlined_call_operand.hbm [shape: f32[8,32], index: 0, kind: input, shape index: {}]
  %s1 = inlined_call_operand.hbm [shape: f32[8,128], index: 1, kind: input, shape index: {}]
  %s2 = inlined_call_operand.hbm [shape: bf16[32,256], index: 2, kind: input, shape index: {}]
  %s3 = inlined_call_operand.vmem [shape: f32[1,256], index: 3, kind: input, shape index: {}]
  %s4 = inlined_call_operand.hbm [shape: bf16[256,256], index: 4, kind: input, shape index: {}]
  %s5 = inlined_call_operand.vmem [shape: f32[1,256], index: 5, kind: input, shape index: {}]
  %s6 = inlined_call_operand.hbm [shape: bf16[256,128], index: 6, kind: input, shape index: {}]
  %s7 = inlined_call_operand.hbm [shape: f32[1,128], index: 7, kind: input, shape index: {}]
  %s8 = inlined_call_operand.vmem [shape: f32[8,128], index: 8, kind: input, shape index: {}]
  %s9 = inlined_call_operand.hbm [shape: bf16[128,256], index: 9, kind: input, shape index: {}]
  %s10 = inlined_call_operand.vmem [shape: f32[1,256], index: 10, kind: input, shape index: {}]
  %s11 = inlined_call_operand.hbm [shape: bf16[256,256], index: 11, kind: input, shape index: {}]
  %s12 = inlined_call_operand.vmem [shape: f32[1,256], index: 12, kind: input, shape index: {}]
  %s13 = inlined_call_operand.hbm [shape: bf16[256,128], index: 13, kind: input, shape index: {}]
  %s14 = inlined_call_operand.vmem [shape: f32[1,128], index: 14, kind: input, shape index: {}]
  %s15 = inlined_call_operand.hbm [shape: f32[8,128], index: 15, kind: output, shape index: {}]
  %s16 = sld [smem:[#allocation0]]
  $region106: #{tpu_custom_call.1} parent=0
    _
  %s18 = ssub.s32 1, %s16
  %s19 = scalar_select 0, %s18, %s16
  $region1: #{tpu_custom_call.1} parent=0
    #allocation2 [shape = 'u8[4096]{0}', space=vmem, size = 0x1000, scoped, tag = 'input window, operand 0, single buffered']
    #allocation3 [shape = 's32[1]{0}', space=sflag, size = 0x4, scoped, tag = 'scoped memory for tpu_custom_call.1']
    #allocation4 [shape = 's32[1]{0}', space=sflag, size = 0x4, scoped, tag = 'scoped memory for tpu_custom_call.1']
    #allocation5 [shape = 'u8[4096]{0}', space=vmem, size = 0x1000, scoped, tag = 'input window, operand 1, single buffered']
    #allocation6 [shape = 's32[1]{0}', space=sflag, size = 0x4, scoped, tag = 'scoped memory for tpu_custom_call.1']
    #allocation7 [shape = 'u8[16384]{0}', space=vmem, size = 0x4000, scoped, tag = 'input window, operand 2, single buffered']
    #allocation8 [shape = 'u8[131072]{0}', space=vmem, size = 0x20000, scoped, tag = 'input window, operand 4, single buffered']
    #allocation9 [shape = 's32[1]{0}', space=sflag, size = 0x4, scoped, tag = 'scoped memory for tpu_custom_call.1']
    #allocation10 [shape = 'u8[65536]{0}', space=vmem, size = 0x10000, scoped, tag = 'input window, operand 6, single buffered']
    #allocation11 [shape = 'u8[512]{0}', space=vmem, size = 0x400, scoped, tag = 'input window, operand 7, single buffered']
    #allocation12 [shape = 's32[1]{0}', space=sflag, size = 0x4, scoped, tag = 'scoped memory for tpu_custom_call.1']
    #allocation13 [shape = 'u8[65536]{0}', space=vmem, size = 0x10000, scoped, tag = 'input window, operand 9, single buffered']
    #allocation14 [shape = 'u8[131072]{0}', space=vmem, size = 0x20000, scoped, tag = 'input window, operand 11, single buffered']
    #allocation15 [shape = 's32[1]{0}', space=sflag, size = 0x4, scoped, tag = 'scoped memory for tpu_custom_call.1']
    #allocation16 [shape = 'u8[65536]{0}', space=vmem, size = 0x10000, scoped, tag = 'input window, operand 13, single buffered']
    #allocation17 [shape = 'u8[4096]{0}', space=vmem, size = 0x1000, scoped, tag = 'output window, operand 0, single buffered']
    %20 = vsyncpa [#allocation3], 0
    %21 = vsyncpa [#allocation6], 0
    %22 = vsyncpa [#allocation9], 0
    %23 = vsyncpa [#allocation12], 0
    %24 = vsyncpa [#allocation15], 0
    %25 = vsyncpa [#allocation4], 0
    // Predicated region
    $region2: #{tpu_custom_call.1} parent=1 // pred_check
      _
    $region3: #{tpu_custom_call.1} parent=1 // pred_check_branch
      %27 = sbr.rel (0) target = $region5
    $region4: #{tpu_custom_call.1} parent=1 // pred_region
      %s29 = ssub.s32 128, 128
      %30 = vsyncadd [#allocation3], %s29
      %s32 = sshll.u32 [#allocation2], 4
      %s33 = int_to_ptr.vmem [resolvable:$true] %s32
      %35 = dma.hbm_to_vmem [thread:$0]  %s0, 128, %s33, [#allocation3]
    $region5: #{tpu_custom_call.1} parent=1 // pred_fallthru
      _
    // Predicated region
    $region6: #{tpu_custom_call.1} parent=1 // pred_check
      _
    $region7: #{tpu_custom_call.1} parent=1 // pred_check_branch
      %37 = sbr.rel (0) target = $region9
    $region8: #{tpu_custom_call.1} parent=1 // pred_region
      %s39 = ssub.s32 128, 128
      %40 = vsyncadd [#allocation6], %s39
      %s42 = sshll.u32 [#allocation5], 4
      %s43 = int_to_ptr.vmem [resolvable:$true] %s42
      %45 = dma.hbm_to_vmem [thread:$0]  %s1, 128, %s43, [#allocation6]
    $region9: #{tpu_custom_call.1} parent=1 // pred_fallthru
      _
    // Predicated region
    $region10: #{tpu_custom_call.1} parent=1 // pred_check
      _
    $region11: #{tpu_custom_call.1} parent=1 // pred_check_branch
      %47 = sbr.rel (0) target = $region13
    $region12: #{tpu_custom_call.1} parent=1 // pred_region
      %s49 = ssub.s32 512, 512
      %50 = vsyncadd [#allocation6], %s49
      %s51 = sshll.u32 [#allocation7], 4
      %s52 = int_to_ptr.vmem [resolvable:$true] %s51
      %57 = dma.hbm_to_vmem [thread:$0]  %s2, 512, %s52, [#allocation6], 128, 128, 8
    $region13: #{tpu_custom_call.1} parent=1 // pred_fallthru
      _
    // Predicated region
    $region14: #{tpu_custom_call.1} parent=1 // pred_check
      _
    $region15: #{tpu_custom_call.1} parent=1 // pred_check_branch
      %59 = sbr.rel (0) target = $region17
    $region16: #{tpu_custom_call.1} parent=1 // pred_region
      _
    $region17: #{tpu_custom_call.1} parent=1 // pred_fallthru
      _
    // Predicated region
    $region18: #{tpu_custom_call.1} parent=1 // pred_check
      _
    $region19: #{tpu_custom_call.1} parent=1 // pred_check_branch
      %61 = sbr.rel (0) target = $region21
    $region20: #{tpu_custom_call.1} parent=1 // pred_region
      %s63 = ssub.s32 4096, 4096
      %64 = vsyncadd [#allocation9], %s63
      %s65 = sshll.u32 [#allocation8], 4
      %s66 = int_to_ptr.vmem [resolvable:$true] %s65
      %71 = dma.hbm_to_vmem [thread:$0]  %s4, 4096, %s66, [#allocation9], 128, 128, 8
    $region21: #{tpu_custom_call.1} parent=1 // pred_fallthru
      _
    // Predicated region
    $region22: #{tpu_custom_call.1} parent=1 // pred_check
      _
    $region23: #{tpu_custom_call.1} parent=1 // pred_check_branch
      %73 = sbr.rel (0) target = $region25
    $region24: #{tpu_custom_call.1} parent=1 // pred_region
      _
    $region25: #{tpu_custom_call.1} parent=1 // pred_fallthru
      _
    // Predicated region
    $region26: #{tpu_custom_call.1} parent=1 // pred_check
      _
    $region27: #{tpu_custom_call.1} parent=1 // pred_check_branch
      %75 = sbr.rel (0) target = $region29
    $region28: #{tpu_custom_call.1} parent=1 // pred_region
      %s77 = ssub.s32 2048, 2048
      %78 = vsyncadd [#allocation9], %s77
      %s79 = sshll.u32 [#allocation10], 4
      %s80 = int_to_ptr.vmem [resolvable:$true] %s79
      %85 = dma.hbm_to_vmem [thread:$0]  %s6, 2048, %s80, [#allocation9], 64, 64, 4
    $region29: #{tpu_custom_call.1} parent=1 // pred_fallthru
      _
    // Predicated region
    $region30: #{tpu_custom_call.1} parent=1 // pred_check
      _
    $region31: #{tpu_custom_call.1} parent=1 // pred_check_branch
      %87 = sbr.rel (0) target = $region33
    $region32: #{tpu_custom_call.1} parent=1 // pred_region
      %s89 = ssub.s32 16, 16
      %90 = vsyncadd [#allocation12], %s89
      %s92 = sshll.u32 [#allocation11], 4
      %s93 = int_to_ptr.vmem [resolvable:$true] %s92
      %95 = dma.hbm_to_vmem [thread:$0]  %s7, 16, %s93, [#allocation12]
    $region33: #{tpu_custom_call.1} parent=1 // pred_fallthru
      _
    // Predicated region
    $region34: #{tpu_custom_call.1} parent=1 // pred_check
      _
    $region35: #{tpu_custom_call.1} parent=1 // pred_check_branch
      %97 = sbr.rel (0) target = $region37
    $region36: #{tpu_custom_call.1} parent=1 // pred_region
      _
    $region37: #{tpu_custom_call.1} parent=1 // pred_fallthru
      _
    // Predicated region
    $region38: #{tpu_custom_call.1} parent=1 // pred_check
      _
    $region39: #{tpu_custom_call.1} parent=1 // pred_check_branch
      %99 = sbr.rel (0) target = $region41
    $region40: #{tpu_custom_call.1} parent=1 // pred_region
      %s101 = ssub.s32 2048, 2048
      %102 = vsyncadd [#allocation12], %s101
      %s103 = sshll.u32 [#allocation13], 4
      %s104 = int_to_ptr.vmem [resolvable:$true] %s103
      %109 = dma.hbm_to_vmem [thread:$0]  %s9, 2048, %s104, [#allocation12], 128, 128, 8
    $region41: #{tpu_custom_call.1} parent=1 // pred_fallthru
      _
    // Predicated region
    $region42: #{tpu_custom_call.1} parent=1 // pred_check
      _
    $region43: #{tpu_custom_call.1} parent=1 // pred_check_branch
      %111 = sbr.rel (0) target = $region45
    $region44: #{tpu_custom_call.1} parent=1 // pred_region
      _
    $region45: #{tpu_custom_call.1} parent=1 // pred_fallthru
      _
    // Predicated region
    $region46: #{tpu_custom_call.1} parent=1 // pred_check
      _
    $region47: #{tpu_custom_call.1} parent=1 // pred_check_branch
      %113 = sbr.rel (0) target = $region49
    $region48: #{tpu_custom_call.1} parent=1 // pred_region
      %s115 = ssub.s32 4096, 4096
      %116 = vsyncadd [#allocation15], %s115
      %s117 = sshll.u32 [#allocation14], 4
      %s118 = int_to_ptr.vmem [resolvable:$true] %s117
      %123 = dma.hbm_to_vmem [thread:$0]  %s11, 4096, %s118, [#allocation15], 128, 128, 8
    $region49: #{tpu_custom_call.1} parent=1 // pred_fallthru
      _
    // Predicated region
    $region50: #{tpu_custom_call.1} parent=1 // pred_check
      _
    $region51: #{tpu_custom_call.1} parent=1 // pred_check_branch
      %125 = sbr.rel (0) target = $region53
    $region52: #{tpu_custom_call.1} parent=1 // pred_region
      _
    $region53: #{tpu_custom_call.1} parent=1 // pred_fallthru
      _
    // Predicated region
    $region54: #{tpu_custom_call.1} parent=1 // pred_check
      _
    $region55: #{tpu_custom_call.1} parent=1 // pred_check_branch
      %127 = sbr.rel (0) target = $region57
    $region56: #{tpu_custom_call.1} parent=1 // pred_region
      %s129 = ssub.s32 2048, 2048
      %130 = vsyncadd [#allocation15], %s129
      %s131 = sshll.u32 [#allocation16], 4
      %s132 = int_to_ptr.vmem [resolvable:$true] %s131
      %137 = dma.hbm_to_vmem [thread:$0]  %s13, 2048, %s132, [#allocation15], 64, 64, 4
    $region57: #{tpu_custom_call.1} parent=1 // pred_fallthru
      _
    // Predicated region
    $region58: #{tpu_custom_call.1} parent=1 // pred_check
      _
    $region59: #{tpu_custom_call.1} parent=1 // pred_check_branch
      %139 = sbr.rel (0) target = $region61
    $region60: #{tpu_custom_call.1} parent=1 // pred_region
      _
    $region61: #{tpu_custom_call.1} parent=1 // pred_fallthru
      _
    // Predicated region
    $region62: #{tpu_custom_call.1} parent=1 // pred_check
      _
    $region63: #{tpu_custom_call.1} parent=1 // pred_check_branch
      %141 = sbr.rel (0) target = $region65
    $region64: #{tpu_custom_call.1} parent=1 // pred_region
      %142 = dma.done [#allocation3], 128
    $region65: #{tpu_custom_call.1} parent=1 // pred_fallthru
      _
    // Predicated region
    $region66: #{tpu_custom_call.1} parent=1 // pred_check
      _
    $region67: #{tpu_custom_call.1} parent=1 // pred_check_branch
      %144 = sbr.rel (0) target = $region69
    $region68: #{tpu_custom_call.1} parent=1 // pred_region
      %145 = dma.done [#allocation6], 128
    $region69: #{tpu_custom_call.1} parent=1 // pred_fallthru
      _
    // Predicated region
    $region70: #{tpu_custom_call.1} parent=1 // pred_check
      _
    $region71: #{tpu_custom_call.1} parent=1 // pred_check_branch
      %147 = sbr.rel (0) target = $region73
    $region72: #{tpu_custom_call.1} parent=1 // pred_region
      %148 = dma.done [#allocation6], 512
    $region73: #{tpu_custom_call.1} parent=1 // pred_fallthru
      _
    // Predicated region
    $region74: #{tpu_custom_call.1} parent=1 // pred_check
      _
    $region75: #{tpu_custom_call.1} parent=1 // pred_check_branch
      %150 = sbr.rel (0) target = $region77
    $region76: #{tpu_custom_call.1} parent=1 // pred_region
      %151 = dma.done [#allocation9], 4096
    $region77: #{tpu_custom_call.1} parent=1 // pred_fallthru
      _
    // Predicated region
    $region78: #{tpu_custom_call.1} parent=1 // pred_check
      _
    $region79: #{tpu_custom_call.1} parent=1 // pred_check_branch
      %153 = sbr.rel (0) target = $region81
    $region80: #{tpu_custom_call.1} parent=1 // pred_region
      %154 = dma.done [#allocation9], 2048
    $region81: #{tpu_custom_call.1} parent=1 // pred_fallthru
      _
    // Predicated region
    $region82: #{tpu_custom_call.1} parent=1 // pred_check
      _
    $region83: #{tpu_custom_call.1} parent=1 // pred_check_branch
      %156 = sbr.rel (0) target = $region85
    $region84: #{tpu_custom_call.1} parent=1 // pred_region
      %157 = dma.done [#allocation12], 16
    $region85: #{tpu_custom_call.1} parent=1 // pred_fallthru
      _
    // Predicated region
    $region86: #{tpu_custom_call.1} parent=1 // pred_check
      _
    $region87: #{tpu_custom_call.1} parent=1 // pred_check_branch
      %159 = sbr.rel (0) target = $region89
    $region88: #{tpu_custom_call.1} parent=1 // pred_region
      %160 = dma.done [#allocation12], 2048
    $region89: #{tpu_custom_call.1} parent=1 // pred_fallthru
      _
    // Predicated region
    $region90: #{tpu_custom_call.1} parent=1 // pred_check
      _
    $region91: #{tpu_custom_call.1} parent=1 // pred_check_branch
      %162 = sbr.rel (0) target = $region93
    $region92: #{tpu_custom_call.1} parent=1 // pred_region
      %163 = dma.done [#allocation15], 4096
    $region93: #{tpu_custom_call.1} parent=1 // pred_fallthru
      _
    // Predicated region
    $region94: #{tpu_custom_call.1} parent=1 // pred_check
      _
    $region95: #{tpu_custom_call.1} parent=1 // pred_check_branch
      %165 = sbr.rel (0) target = $region97
    $region96: #{tpu_custom_call.1} parent=1 // pred_region
      %166 = dma.done [#allocation15], 2048
    $region97: #{tpu_custom_call.1} parent=1 // pred_fallthru
      _
    %v168 = vld [vmem:[#allocation2] sm:$0xff]
    %v169 = vpack.c.bf16 %v168, %v168
    %v170 = vld [vmem:[#allocation5] sm:$0xff]
    %v171 = vld [vmem:[#allocation7] sm:$0xff]
    %v172 = vld [vmem:[#allocation7 + $0x8] sm:$0xff]
    %v173 = vld [vmem:[#allocation7 + $0x10] sm:$0xff]
    %v174 = vld [vmem:[#allocation7 + $0x18] sm:$0xff]
    %v175 = vld [vmem:[%s3] sm:$0x3]
    %v177 = vlaneseq
    %v178 = vshrl.u32 %v177, 7
    %v179 = vsub.s32 0, %v178
    %v180 = vrot.slane %v175, %v179
    %v181 = vlaneseq
    %v182 = vshrl.u32 %v181, 7
    %v183 = vsub.s32 1, %v182
    %v184 = vrot.slane %v175, %v183
    %v191 = vunpack.c.l.b16 %v171
    %v192 = vunpack.c.h.b16 %v171
    %v193 = vunpack.c.l.b16 %v172
    %v194 = vunpack.c.h.b16 %v172
    %v195 = vunpack.c.l.b16 %v173
    %v196 = vunpack.c.h.b16 %v173
    %v197 = vunpack.c.l.b16 %v174
    %v198 = vunpack.c.h.b16 %v174
    %v199 = vpack.c.b16 %v193, %v191
    %v200 = vpack.c.b16 %v194, %v192
    %v201 = vpack.c.b16 %v197, %v195
    %v202 = vpack.c.b16 %v198, %v196
    %vm207 = vcmask 261120
    %v209 = vsel %vm207, %v169, 0
    %211 = vmatprep.subr.bf16.mxu0 0
    %212 = vmatpush1.bf16.msra.mxu0 0
    %213 = vmatprep.subr.bf16.mxu0 0
    %214 = vmatpush1.bf16.msra.mxu0 0
    %215 = vmatprep.subr.bf16.mxu0 0
    %216 = vmatpush1.bf16.msra.mxu0 0
    %217 = vmatprep.subr.bf16.mxu0 0
    %218 = vmatpush1.bf16.msra.mxu0 0
    %219 = vmatprep.subr.bf16.mxu0 0
    %220 = vmatpush1.bf16.msra.mxu0 0
    %221 = vmatprep.subr.bf16.mxu0 0
    %222 = vmatpush1.bf16.msra.mxu0 0
    %223 = vmatprep.subr.bf16.mxu0 %v202
    %224 = vmatpush1.bf16.msra.mxu0 %v201
    %225 = vmatprep.subr.bf16.mxu0 %v200
    %226 = vmatpush1.bf16.msra.mxu0 %v199
    %227 = vmatprep.subr.bf16.mxu0 0
    %228 = vmatpush2.bf16.msra.mxu0 0
    %229 = vmatprep.subr.bf16.mxu0 0
    %230 = vmatpush2.bf16.msra.mxu0 0
    %231 = vmatprep.subr.bf16.mxu0 0
    %232 = vmatpush2.bf16.msra.mxu0 0
    %233 = vmatprep.subr.bf16.mxu0 0
    %234 = vmatpush2.bf16.msra.mxu0 0
    %235 = vmatprep.subr.bf16.mxu0 0
    %236 = vmatpush2.bf16.msra.mxu0 0
    %237 = vmatprep.subr.bf16.mxu0 0
    %238 = vmatpush2.bf16.msra.mxu0 0
    %239 = vmatprep.subr.bf16.mxu0 0
    %240 = vmatpush2.bf16.msra.mxu0 0
    %241 = vmatprep.subr.bf16.mxu0 0
    %242 = vmatpush2.bf16.msra.mxu0 0
    %243 = vmatprep.mubr.bf16.mxu0 0
    %244 = vmatmul.mubr.bf16.gmra.mxu0 %v209
    %v245 = vpop.f32.mrf.mxu0
    %v246 = vadd.f32 %v180, %v245
    %v247 = vpop.f32.mrf.mxu0
    %v248 = vadd.f32 %v184, %v247
    %v249 = vpop.f32.mrf.mxu0
    %v250 = vpop.f32.mrf.mxu0
    %251 = vdwg.mxu0
    %v252 = vmax.f32 %v246, 0.0
    %v253 = vmax.f32 %v248, 0.0
    %v254 = vpack.c.bf16 %v252, %v252
    %v255 = vpack.c.bf16 %v253, %v253
    %v256 = vld [vmem:[#allocation8] sm:$0xff]
    %v257 = vld [vmem:[#allocation8 + $0x8] sm:$0xff]
    %v258 = vld [vmem:[#allocation8 + $0x10] sm:$0xff]
    %v259 = vld [vmem:[#allocation8 + $0x18] sm:$0xff]
    %v260 = vld [vmem:[#allocation8 + $0x20] sm:$0xff]
    %v261 = vld [vmem:[#allocation8 + $0x28] sm:$0xff]
    %v262 = vld [vmem:[#allocation8 + $0x30] sm:$0xff]
    %v263 = vld [vmem:[#allocation8 + $0x38] sm:$0xff]
    %v264 = vld [vmem:[#allocation8 + $0x40] sm:$0xff]
    %v265 = vld [vmem:[#allocation8 + $0x48] sm:$0xff]
    %v266 = vld [vmem:[#allocation8 + $0x50] sm:$0xff]
    %v267 = vld [vmem:[#allocation8 + $0x58] sm:$0xff]
    %v268 = vld [vmem:[#allocation8 + $0x60] sm:$0xff]
    %v269 = vld [vmem:[#allocation8 + $0x68] sm:$0xff]
    %v270 = vld [vmem:[#allocation8 + $0x70] sm:$0xff]
    %v271 = vld [vmem:[#allocation8 + $0x78] sm:$0xff]
    %v272 = vld [vmem:[#allocation8 + $0x80] sm:$0xff]
    %v273 = vld [vmem:[#allocation8 + $0x88] sm:$0xff]
    %v274 = vld [vmem:[#allocation8 + $0x90] sm:$0xff]
    %v275 = vld [vmem:[#allocation8 + $0x98] sm:$0xff]
    %v276 = vld [vmem:[#allocation8 + $0xa0] sm:$0xff]
    %v277 = vld [vmem:[#allocation8 + $0xa8] sm:$0xff]
    %v278 = vld [vmem:[#allocation8 + $0xb0] sm:$0xff]
    %v279 = vld [vmem:[#allocation8 + $0xb8] sm:$0xff]
    %v280 = vld [vmem:[#allocation8 + $0xc0] sm:$0xff]
    %v281 = vld [vmem:[#allocation8 + $0xc8] sm:$0xff]
    %v282 = vld [vmem:[#allocation8 + $0xd0] sm:$0xff]
    %v283 = vld [vmem:[#allocation8 + $0xd8] sm:$0xff]
    %v284 = vld [vmem:[#allocation8 + $0xe0] sm:$0xff]
    %v285 = vld [vmem:[#allocation8 + $0xe8] sm:$0xff]
    %v286 = vld [vmem:[#allocation8 + $0xf0] sm:$0xff]
    %v287 = vld [vmem:[#allocation8 + $0xf8] sm:$0xff]
    %v288 = vld [vmem:[%s5] sm:$0x3]
    %v290 = vlaneseq
    %v291 = vshrl.u32 %v290, 7
    %v292 = vsub.s32 0, %v291
    %v293 = vrot.slane %v288, %v292
    %v294 = vlaneseq
    %v295 = vshrl.u32 %v294, 7
    %v296 = vsub.s32 1, %v295
    %v297 = vrot.slane %v288, %v296
    %v332 = vunpack.c.l.b16 %v256
    %v333 = vunpack.c.h.b16 %v256
    %v334 = vunpack.c.l.b16 %v257
    %v335 = vunpack.c.h.b16 %v257
    %v336 = vunpack.c.l.b16 %v258
    %v337 = vunpack.c.h.b16 %v258
    %v338 = vunpack.c.l.b16 %v259
    %v339 = vunpack.c.h.b16 %v259
    %v340 = vunpack.c.l.b16 %v260
    %v341 = vunpack.c.h.b16 %v260
    %v342 = vunpack.c.l.b16 %v261
    %v343 = vunpack.c.h.b16 %v261
    %v344 = vunpack.c.l.b16 %v262
    %v345 = vunpack.c.h.b16 %v262
    %v346 = vunpack.c.l.b16 %v263
    %v347 = vunpack.c.h.b16 %v263
    %v348 = vunpack.c.l.b16 %v264
    %v349 = vunpack.c.h.b16 %v264
    %v350 = vunpack.c.l.b16 %v265
    %v351 = vunpack.c.h.b16 %v265
    %v352 = vunpack.c.l.b16 %v266
    %v353 = vunpack.c.h.b16 %v266
    %v354 = vunpack.c.l.b16 %v267
    %v355 = vunpack.c.h.b16 %v267
    %v356 = vunpack.c.l.b16 %v268
    %v357 = vunpack.c.h.b16 %v268
    %v358 = vunpack.c.l.b16 %v269
    %v359 = vunpack.c.h.b16 %v269
    %v360 = vunpack.c.l.b16 %v270
    %v361 = vunpack.c.h.b16 %v270
    %v362 = vunpack.c.l.b16 %v271
    %v363 = vunpack.c.h.b16 %v271
    %v364 = vunpack.c.l.b16 %v272
    %v365 = vunpack.c.h.b16 %v272
    %v366 = vunpack.c.l.b16 %v273
    %v367 = vunpack.c.h.b16 %v273
    %v368 = vunpack.c.l.b16 %v274
    %v369 = vunpack.c.h.b16 %v274
    %v370 = vunpack.c.l.b16 %v275
    %v371 = vunpack.c.h.b16 %v275
    %v372 = vunpack.c.l.b16 %v276
    %v373 = vunpack.c.h.b16 %v276
    %v374 = vunpack.c.l.b16 %v277
    %v375 = vunpack.c.h.b16 %v277
    %v376 = vunpack.c.l.b16 %v278
    %v377 = vunpack.c.h.b16 %v278
    %v378 = vunpack.c.l.b16 %v279
    %v379 = vunpack.c.h.b16 %v279
    %v380 = vunpack.c.l.b16 %v280
    %v381 = vunpack.c.h.b16 %v280
    %v382 = vunpack.c.l.b16 %v281
    %v383 = vunpack.c.h.b16 %v281
    %v384 = vunpack.c.l.b16 %v282
    %v385 = vunpack.c.h.b16 %v282
    %v386 = vunpack.c.l.b16 %v283
    %v387 = vunpack.c.h.b16 %v283
    %v388 = vunpack.c.l.b16 %v284
    %v389 = vunpack.c.h.b16 %v284
    %v390 = vunpack.c.l.b16 %v285
    %v391 = vunpack.c.h.b16 %v285
    %v392 = vunpack.c.l.b16 %v286
    %v393 = vunpack.c.h.b16 %v286
    %v394 = vunpack.c.l.b16 %v287
    %v395 = vunpack.c.h.b16 %v287
    %v396 = vpack.c.b16 %v334, %v332
    %v397 = vpack.c.b16 %v335, %v333
    %v398 = vpack.c.b16 %v338, %v336
    %v399 = vpack.c.b16 %v339, %v337
    %v400 = vpack.c.b16 %v342, %v340
    %v401 = vpack.c.b16 %v343, %v341
    %v402 = vpack.c.b16 %v346, %v344
    %v403 = vpack.c.b16 %v347, %v345
    %v404 = vpack.c.b16 %v350, %v348
    %v405 = vpack.c.b16 %v351, %v349
    %v406 = vpack.c.b16 %v354, %v352
    %v407 = vpack.c.b16 %v355, %v353
    %v408 = vpack.c.b16 %v358, %v356
    %v409 = vpack.c.b16 %v359, %v357
    %v410 = vpack.c.b16 %v362, %v360
    %v411 = vpack.c.b16 %v363, %v361
    %v412 = vpack.c.b16 %v366, %v364
    %v413 = vpack.c.b16 %v367, %v365
    %v414 = vpack.c.b16 %v370, %v368
    %v415 = vpack.c.b16 %v371, %v369
    %v416 = vpack.c.b16 %v374, %v372
    %v417 = vpack.c.b16 %v375, %v373
    %v418 = vpack.c.b16 %v378, %v376
    %v419 = vpack.c.b16 %v379, %v377
    %v420 = vpack.c.b16 %v382, %v380
    %v421 = vpack.c.b16 %v383, %v381
    %v422 = vpack.c.b16 %v386, %v384
    %v423 = vpack.c.b16 %v387, %v385
    %v424 = vpack.c.b16 %v390, %v388
    %v425 = vpack.c.b16 %v391, %v389
    %v426 = vpack.c.b16 %v394, %v392
    %v427 = vpack.c.b16 %v395, %v393
    %460 = vmatprep.subr.bf16.mxu0 %v411
    %461 = vmatpush1.bf16.msra.mxu0 %v410
    %462 = vmatprep.subr.bf16.mxu0 %v409
    %463 = vmatpush1.bf16.msra.mxu0 %v408
    %464 = vmatprep.subr.bf16.mxu0 %v407
    %465 = vmatpush1.bf16.msra.mxu0 %v406
    %466 = vmatprep.subr.bf16.mxu0 %v405
    %467 = vmatpush1.bf16.msra.mxu0 %v404
    %468 = vmatprep.subr.bf16.mxu0 %v403
    %469 = vmatpush1.bf16.msra.mxu0 %v402
    %470 = vmatprep.subr.bf16.mxu0 %v401
    %471 = vmatpush1.bf16.msra.mxu0 %v400
    %472 = vmatprep.subr.bf16.mxu0 %v399
    %473 = vmatpush1.bf16.msra.mxu0 %v398
    %474 = vmatprep.subr.bf16.mxu0 %v397
    %475 = vmatpush1.bf16.msra.mxu0 %v396
    %476 = vmatprep.subr.bf16.mxu0 %v427
    %477 = vmatpush2.bf16.msra.mxu0 %v426
    %478 = vmatprep.subr.bf16.mxu0 %v425
    %479 = vmatpush2.bf16.msra.mxu0 %v424
    %480 = vmatprep.subr.bf16.mxu0 %v423
    %481 = vmatpush2.bf16.msra.mxu0 %v422
    %482 = vmatprep.subr.bf16.mxu0 %v421
    %483 = vmatpush2.bf16.msra.mxu0 %v420
    %484 = vmatprep.subr.bf16.mxu0 %v419
    %485 = vmatpush2.bf16.msra.mxu0 %v418
    %486 = vmatprep.subr.bf16.mxu0 %v417
    %487 = vmatpush2.bf16.msra.mxu0 %v416
    %488 = vmatprep.subr.bf16.mxu0 %v415
    %489 = vmatpush2.bf16.msra.mxu0 %v414
    %490 = vmatprep.subr.bf16.mxu0 %v413
    %491 = vmatpush2.bf16.msra.mxu0 %v412
    %492 = vmatprep.mubr.bf16.mxu0 %v255
    %493 = vmatmul.mubr.bf16.gmra.mxu0 %v254
    %v494 = vpop.f32.mrf.mxu0
    %v495 = vadd.f32 %v293, %v494
    %v496 = vpop.f32.mrf.mxu0
    %v497 = vadd.f32 %v297, %v496
    %v498 = vpop.f32.mrf.mxu0
    %v499 = vpop.f32.mrf.mxu0
    %500 = vdwg.mxu0
    %v501 = vmax.f32 %v495, 0.0
    %v502 = vmax.f32 %v497, 0.0
    %v503 = vpack.c.bf16 %v501, %v501
    %v504 = vpack.c.bf16 %v502, %v502
    %v505 = vld [vmem:[#allocation10] sm:$0xf]
    %v506 = vld [vmem:[#allocation10 + $0x4] sm:$0xf]
    %v507 = vld [vmem:[#allocation10 + $0x8] sm:$0xf]
    %v508 = vld [vmem:[#allocation10 + $0xc] sm:$0xf]
    %v509 = vld [vmem:[#allocation10 + $0x10] sm:$0xf]
    %v510 = vld [vmem:[#allocation10 + $0x14] sm:$0xf]
    %v511 = vld [vmem:[#allocation10 + $0x18] sm:$0xf]
    %v512 = vld [vmem:[#allocation10 + $0x1c] sm:$0xf]
    %v513 = vld [vmem:[#allocation10 + $0x20] sm:$0xf]
    %v514 = vld [vmem:[#allocation10 + $0x24] sm:$0xf]
    %v515 = vld [vmem:[#allocation10 + $0x28] sm:$0xf]
    %v516 = vld [vmem:[#allocation10 + $0x2c] sm:$0xf]
    %v517 = vld [vmem:[#allocation10 + $0x30] sm:$0xf]
    %v518 = vld [vmem:[#allocation10 + $0x34] sm:$0xf]
    %v519 = vld [vmem:[#allocation10 + $0x38] sm:$0xf]
    %v520 = vld [vmem:[#allocation10 + $0x3c] sm:$0xf]
    %v521 = vld [vmem:[#allocation10 + $0x40] sm:$0xf]
    %v522 = vld [vmem:[#allocation10 + $0x44] sm:$0xf]
    %v523 = vld [vmem:[#allocation10 + $0x48] sm:$0xf]
    %v524 = vld [vmem:[#allocation10 + $0x4c] sm:$0xf]
    %v525 = vld [vmem:[#allocation10 + $0x50] sm:$0xf]
    %v526 = vld [vmem:[#allocation10 + $0x54] sm:$0xf]
    %v527 = vld [vmem:[#allocation10 + $0x58] sm:$0xf]
    %v528 = vld [vmem:[#allocation10 + $0x5c] sm:$0xf]
    %v529 = vld [vmem:[#allocation10 + $0x60] sm:$0xf]
    %v530 = vld [vmem:[#allocation10 + $0x64] sm:$0xf]
    %v531 = vld [vmem:[#allocation10 + $0x68] sm:$0xf]
    %v532 = vld [vmem:[#allocation10 + $0x6c] sm:$0xf]
    %v533 = vld [vmem:[#allocation10 + $0x70] sm:$0xf]
    %v534 = vld [vmem:[#allocation10 + $0x74] sm:$0xf]
    %v535 = vld [vmem:[#allocation10 + $0x78] sm:$0xf]
    %v536 = vld [vmem:[#allocation10 + $0x7c] sm:$0xf]
    %v537 = vld [vmem:[#allocation11] sm:$0x1]
    %v539 = vlaneseq
    %v540 = vshrl.u32 %v539, 7
    %v541 = vsub.s32 0, %v540
    %v542 = vrot.slane %v537, %v541
    %v576 = vunpack.c.l.b16 %v505
    %v577 = vunpack.c.l.b16 %v506
    %v578 = vunpack.c.l.b16 %v507
    %v579 = vunpack.c.l.b16 %v508
    %v580 = vunpack.c.l.b16 %v509
    %v581 = vunpack.c.l.b16 %v510
    %v582 = vunpack.c.l.b16 %v511
    %v583 = vunpack.c.l.b16 %v512
    %v584 = vunpack.c.l.b16 %v513
    %v585 = vunpack.c.l.b16 %v514
    %v586 = vunpack.c.l.b16 %v515
    %v587 = vunpack.c.l.b16 %v516
    %v588 = vunpack.c.l.b16 %v517
    %v589 = vunpack.c.l.b16 %v518
    %v590 = vunpack.c.l.b16 %v519
    %v591 = vunpack.c.l.b16 %v520
    %v592 = vunpack.c.l.b16 %v521
    %v593 = vunpack.c.l.b16 %v522
    %v594 = vunpack.c.l.b16 %v523
    %v595 = vunpack.c.l.b16 %v524
    %v596 = vunpack.c.l.b16 %v525
    %v597 = vunpack.c.l.b16 %v526
    %v598 = vunpack.c.l.b16 %v527
    %v599 = vunpack.c.l.b16 %v528
    %v600 = vunpack.c.l.b16 %v529
    %v601 = vunpack.c.l.b16 %v530
    %v602 = vunpack.c.l.b16 %v531
    %v603 = vunpack.c.l.b16 %v532
    %v604 = vunpack.c.l.b16 %v533
    %v605 = vunpack.c.l.b16 %v534
    %v606 = vunpack.c.l.b16 %v535
    %v607 = vunpack.c.l.b16 %v536
    %v608 = vpack.c.b16 %v577, %v576
    %v609 = vpack.c.b16 %v579, %v578
    %v610 = vpack.c.b16 %v581, %v580
    %v611 = vpack.c.b16 %v583, %v582
    %v612 = vpack.c.b16 %v585, %v584
    %v613 = vpack.c.b16 %v587, %v586
    %v614 = vpack.c.b16 %v589, %v588
    %v615 = vpack.c.b16 %v591, %v590
    %v616 = vpack.c.b16 %v593, %v592
    %v617 = vpack.c.b16 %v595, %v594
    %v618 = vpack.c.b16 %v597, %v596
    %v619 = vpack.c.b16 %v599, %v598
    %v620 = vpack.c.b16 %v601, %v600
    %v621 = vpack.c.b16 %v603, %v602
    %v622 = vpack.c.b16 %v605, %v604
    %v623 = vpack.c.b16 %v607, %v606
    %640 = vmatprep.subr.bf16.mxu0 0
    %641 = vmatpush1.bf16.msra.mxu0 %v615
    %642 = vmatprep.subr.bf16.mxu0 0
    %643 = vmatpush1.bf16.msra.mxu0 %v614
    %644 = vmatprep.subr.bf16.mxu0 0
    %645 = vmatpush1.bf16.msra.mxu0 %v613
    %646 = vmatprep.subr.bf16.mxu0 0
    %647 = vmatpush1.bf16.msra.mxu0 %v612
    %648 = vmatprep.subr.bf16.mxu0 0
    %649 = vmatpush1.bf16.msra.mxu0 %v611
    %650 = vmatprep.subr.bf16.mxu0 0
    %651 = vmatpush1.bf16.msra.mxu0 %v610
    %652 = vmatprep.subr.bf16.mxu0 0
    %653 = vmatpush1.bf16.msra.mxu0 %v609
    %654 = vmatprep.subr.bf16.mxu0 0
    %655 = vmatpush1.bf16.msra.mxu0 %v608
    %656 = vmatprep.subr.bf16.mxu0 0
    %657 = vmatpush2.bf16.msra.mxu0 %v623
    %658 = vmatprep.subr.bf16.mxu0 0
    %659 = vmatpush2.bf16.msra.mxu0 %v622
    %660 = vmatprep.subr.bf16.mxu0 0
    %661 = vmatpush2.bf16.msra.mxu0 %v621
    %662 = vmatprep.subr.bf16.mxu0 0
    %663 = vmatpush2.bf16.msra.mxu0 %v620
    %664 = vmatprep.subr.bf16.mxu0 0
    %665 = vmatpush2.bf16.msra.mxu0 %v619
    %666 = vmatprep.subr.bf16.mxu0 0
    %667 = vmatpush2.bf16.msra.mxu0 %v618
    %668 = vmatprep.subr.bf16.mxu0 0
    %669 = vmatpush2.bf16.msra.mxu0 %v617
    %670 = vmatprep.subr.bf16.mxu0 0
    %671 = vmatpush2.bf16.msra.mxu0 %v616
    %672 = vmatprep.mubr.bf16.mxu0 %v504
    %673 = vmatmul.mubr.bf16.gmra.mxu0 %v503
    %v674 = vpop.f32.mrf.mxu0
    %v675 = vadd.f32 %v542, %v674
    %v676 = vpop.f32.mrf.mxu0
    %v677 = vpop.f32.mrf.mxu0
    %v678 = vpop.f32.mrf.mxu0
    %679 = vdwg.mxu0
    %v680 = vmul.f32 %v675, 0.5
    %v681 = vmul.f32 %v680, 1.442695
    %v682 = vpow.pop %v681
    %v683 = vld [vmem:[%s8] sm:$0xff]
    %v684 = vlaneseq
    %v685 = vshrl.u32 %v684, 7
    %v686 = vsub.s32 0, %v685
    %v687 = vrot.slane %v683, %v686
    %v688 = vmul.f32 %v675, %v687
    %v689 = vmul.f32 %v170, %v682
    %v690 = vadd.f32 %v688, %v689
    %v691 = vpack.c.bf16 %v690, %v690
    %v692 = vld [vmem:[#allocation13] sm:$0xff]
    %v693 = vld [vmem:[#allocation13 + $0x8] sm:$0xff]
    %v694 = vld [vmem:[#allocation13 + $0x10] sm:$0xff]
    %v695 = vld [vmem:[#allocation13 + $0x18] sm:$0xff]
    %v696 = vld [vmem:[#allocation13 + $0x20] sm:$0xff]
    %v697 = vld [vmem:[#allocation13 + $0x28] sm:$0xff]
    %v698 = vld [vmem:[#allocation13 + $0x30] sm:$0xff]
    %v699 = vld [vmem:[#allocation13 + $0x38] sm:$0xff]
    %v700 = vld [vmem:[#allocation13 + $0x40] sm:$0xff]
    %v701 = vld [vmem:[#allocation13 + $0x48] sm:$0xff]
    %v702 = vld [vmem:[#allocation13 + $0x50] sm:$0xff]
    %v703 = vld [vmem:[#allocation13 + $0x58] sm:$0xff]
    %v704 = vld [vmem:[#allocation13 + $0x60] sm:$0xff]
    %v705 = vld [vmem:[#allocation13 + $0x68] sm:$0xff]
    %v706 = vld [vmem:[#allocation13 + $0x70] sm:$0xff]
    %v707 = vld [vmem:[#allocation13 + $0x78] sm:$0xff]
    %v708 = vld [vmem:[%s10] sm:$0x3]
    %v710 = vlaneseq
    %v711 = vshrl.u32 %v710, 7
    %v712 = vsub.s32 0, %v711
    %v713 = vrot.slane %v708, %v712
    %v714 = vlaneseq
    %v715 = vshrl.u32 %v714, 7
    %v716 = vsub.s32 1, %v715
    %v717 = vrot.slane %v708, %v716
    %v736 = vunpack.c.l.b16 %v692
    %v737 = vunpack.c.h.b16 %v692
    %v738 = vunpack.c.l.b16 %v693
    %v739 = vunpack.c.h.b16 %v693
    %v740 = vunpack.c.l.b16 %v694
    %v741 = vunpack.c.h.b16 %v694
    %v742 = vunpack.c.l.b16 %v695
    %v743 = vunpack.c.h.b16 %v695
    %v744 = vunpack.c.l.b16 %v696
    %v745 = vunpack.c.h.b16 %v696
    %v746 = vunpack.c.l.b16 %v697
    %v747 = vunpack.c.h.b16 %v697
    %v748 = vunpack.c.l.b16 %v698
    %v749 = vunpack.c.h.b16 %v698
    %v750 = vunpack.c.l.b16 %v699
    %v751 = vunpack.c.h.b16 %v699
    %v752 = vunpack.c.l.b16 %v700
    %v753 = vunpack.c.h.b16 %v700
    %v754 = vunpack.c.l.b16 %v701
    %v755 = vunpack.c.h.b16 %v701
    %v756 = vunpack.c.l.b16 %v702
    %v757 = vunpack.c.h.b16 %v702
    %v758 = vunpack.c.l.b16 %v703
    %v759 = vunpack.c.h.b16 %v703
    %v760 = vunpack.c.l.b16 %v704
    %v761 = vunpack.c.h.b16 %v704
    %v762 = vunpack.c.l.b16 %v705
    %v763 = vunpack.c.h.b16 %v705
    %v764 = vunpack.c.l.b16 %v706
    %v765 = vunpack.c.h.b16 %v706
    %v766 = vunpack.c.l.b16 %v707
    %v767 = vunpack.c.h.b16 %v707
    %v768 = vpack.c.b16 %v738, %v736
    %v769 = vpack.c.b16 %v739, %v737
    %v770 = vpack.c.b16 %v742, %v740
    %v771 = vpack.c.b16 %v743, %v741
    %v772 = vpack.c.b16 %v746, %v744
    %v773 = vpack.c.b16 %v747, %v745
    %v774 = vpack.c.b16 %v750, %v748
    %v775 = vpack.c.b16 %v751, %v749
    %v776 = vpack.c.b16 %v754, %v752
    %v777 = vpack.c.b16 %v755, %v753
    %v778 = vpack.c.b16 %v758, %v756
    %v779 = vpack.c.b16 %v759, %v757
    %v780 = vpack.c.b16 %v762, %v760
    %v781 = vpack.c.b16 %v763, %v761
    %v782 = vpack.c.b16 %v766, %v764
    %v783 = vpack.c.b16 %v767, %v765
    %800 = vmatprep.subr.bf16.mxu0 %v783
    %801 = vmatpush1.bf16.msra.mxu0 %v782
    %802 = vmatprep.subr.bf16.mxu0 %v781
    %803 = vmatpush1.bf16.msra.mxu0 %v780
    %804 = vmatprep.subr.bf16.mxu0 %v779
    %805 = vmatpush1.bf16.msra.mxu0 %v778
    %806 = vmatprep.subr.bf16.mxu0 %v777
    %807 = vmatpush1.bf16.msra.mxu0 %v776
    %808 = vmatprep.subr.bf16.mxu0 %v775
    %809 = vmatpush1.bf16.msra.mxu0 %v774
    %810 = vmatprep.subr.bf16.mxu0 %v773
    %811 = vmatpush1.bf16.msra.mxu0 %v772
    %812 = vmatprep.subr.bf16.mxu0 %v771
    %813 = vmatpush1.bf16.msra.mxu0 %v770
    %814 = vmatprep.subr.bf16.mxu0 %v769
    %815 = vmatpush1.bf16.msra.mxu0 %v768
    %816 = vmatprep.subr.bf16.mxu0 0
    %817 = vmatpush2.bf16.msra.mxu0 0
    %818 = vmatprep.subr.bf16.mxu0 0
    %819 = vmatpush2.bf16.msra.mxu0 0
    %820 = vmatprep.subr.bf16.mxu0 0
    %821 = vmatpush2.bf16.msra.mxu0 0
    %822 = vmatprep.subr.bf16.mxu0 0
    %823 = vmatpush2.bf16.msra.mxu0 0
    %824 = vmatprep.subr.bf16.mxu0 0
    %825 = vmatpush2.bf16.msra.mxu0 0
    %826 = vmatprep.subr.bf16.mxu0 0
    %827 = vmatpush2.bf16.msra.mxu0 0
    %828 = vmatprep.subr.bf16.mxu0 0
    %829 = vmatpush2.bf16.msra.mxu0 0
    %830 = vmatprep.subr.bf16.mxu0 0
    %831 = vmatpush2.bf16.msra.mxu0 0
    %832 = vmatprep.mubr.bf16.mxu0 0
    %833 = vmatmul.mubr.bf16.gmra.mxu0 %v691
    %v834 = vpop.f32.mrf.mxu0
    %v835 = vadd.f32 %v713, %v834
    %v836 = vpop.f32.mrf.mxu0
    %v837 = vadd.f32 %v717, %v836
    %v838 = vpop.f32.mrf.mxu0
    %v839 = vpop.f32.mrf.mxu0
    %840 = vdwg.mxu0
    %v841 = vmax.f32 %v835, 0.0
    %v842 = vmax.f32 %v837, 0.0
    %v843 = vpack.c.bf16 %v841, %v841
    %v844 = vpack.c.bf16 %v842, %v842
    %v845 = vld [vmem:[#allocation14] sm:$0xff]
    %v846 = vld [vmem:[#allocation14 + $0x8] sm:$0xff]
    %v847 = vld [vmem:[#allocation14 + $0x10] sm:$0xff]
    %v848 = vld [vmem:[#allocation14 + $0x18] sm:$0xff]
    %v849 = vld [vmem:[#allocation14 + $0x20] sm:$0xff]
    %v850 = vld [vmem:[#allocation14 + $0x28] sm:$0xff]
    %v851 = vld [vmem:[#allocation14 + $0x30] sm:$0xff]
    %v852 = vld [vmem:[#allocation14 + $0x38] sm:$0xff]
    %v853 = vld [vmem:[#allocation14 + $0x40] sm:$0xff]
    %v854 = vld [vmem:[#allocation14 + $0x48] sm:$0xff]
    %v855 = vld [vmem:[#allocation14 + $0x50] sm:$0xff]
    %v856 = vld [vmem:[#allocation14 + $0x58] sm:$0xff]
    %v857 = vld [vmem:[#allocation14 + $0x60] sm:$0xff]
    %v858 = vld [vmem:[#allocation14 + $0x68] sm:$0xff]
    %v859 = vld [vmem:[#allocation14 + $0x70] sm:$0xff]
    %v860 = vld [vmem:[#allocation14 + $0x78] sm:$0xff]
    %v861 = vld [vmem:[#allocation14 + $0x80] sm:$0xff]
    %v862 = vld [vmem:[#allocation14 + $0x88] sm:$0xff]
    %v863 = vld [vmem:[#allocation14 + $0x90] sm:$0xff]
    %v864 = vld [vmem:[#allocation14 + $0x98] sm:$0xff]
    %v865 = vld [vmem:[#allocation14 + $0xa0] sm:$0xff]
    %v866 = vld [vmem:[#allocation14 + $0xa8] sm:$0xff]
    %v867 = vld [vmem:[#allocation14 + $0xb0] sm:$0xff]
    %v868 = vld [vmem:[#allocation14 + $0xb8] sm:$0xff]
    %v869 = vld [vmem:[#allocation14 + $0xc0] sm:$0xff]
    %v870 = vld [vmem:[#allocation14 + $0xc8] sm:$0xff]
    %v871 = vld [vmem:[#allocation14 + $0xd0] sm:$0xff]
    %v872 = vld [vmem:[#allocation14 + $0xd8] sm:$0xff]
    %v873 = vld [vmem:[#allocation14 + $0xe0] sm:$0xff]
    %v874 = vld [vmem:[#allocation14 + $0xe8] sm:$0xff]
    %v875 = vld [vmem:[#allocation14 + $0xf0] sm:$0xff]
    %v876 = vld [vmem:[#allocation14 + $0xf8] sm:$0xff]
    %v877 = vld [vmem:[%s12] sm:$0x3]
    %v879 = vlaneseq
    %v880 = vshrl.u32 %v879, 7
    %v881 = vsub.s32 0, %v880
    %v882 = vrot.slane %v877, %v881
    %v883 = vlaneseq
    %v884 = vshrl.u32 %v883, 7
    %v885 = vsub.s32 1, %v884
    %v886 = vrot.slane %v877, %v885
    %v921 = vunpack.c.l.b16 %v845
    %v922 = vunpack.c.h.b16 %v845
    %v923 = vunpack.c.l.b16 %v846
    %v924 = vunpack.c.h.b16 %v846
    %v925 = vunpack.c.l.b16 %v847
    %v926 = vunpack.c.h.b16 %v847
    %v927 = vunpack.c.l.b16 %v848
    %v928 = vunpack.c.h.b16 %v848
    %v929 = vunpack.c.l.b16 %v849
    %v930 = vunpack.c.h.b16 %v849
    %v931 = vunpack.c.l.b16 %v850
    %v932 = vunpack.c.h.b16 %v850
    %v933 = vunpack.c.l.b16 %v851
    %v934 = vunpack.c.h.b16 %v851
    %v935 = vunpack.c.l.b16 %v852
    %v936 = vunpack.c.h.b16 %v852
    %v937 = vunpack.c.l.b16 %v853
    %v938 = vunpack.c.h.b16 %v853
    %v939 = vunpack.c.l.b16 %v854
    %v940 = vunpack.c.h.b16 %v854
    %v941 = vunpack.c.l.b16 %v855
    %v942 = vunpack.c.h.b16 %v855
    %v943 = vunpack.c.l.b16 %v856
    %v944 = vunpack.c.h.b16 %v856
    %v945 = vunpack.c.l.b16 %v857
    %v946 = vunpack.c.h.b16 %v857
    %v947 = vunpack.c.l.b16 %v858
    %v948 = vunpack.c.h.b16 %v858
    %v949 = vunpack.c.l.b16 %v859
    %v950 = vunpack.c.h.b16 %v859
    %v951 = vunpack.c.l.b16 %v860
    %v952 = vunpack.c.h.b16 %v860
    %v953 = vunpack.c.l.b16 %v861
    %v954 = vunpack.c.h.b16 %v861
    %v955 = vunpack.c.l.b16 %v862
    %v956 = vunpack.c.h.b16 %v862
    %v957 = vunpack.c.l.b16 %v863
    %v958 = vunpack.c.h.b16 %v863
    %v959 = vunpack.c.l.b16 %v864
    %v960 = vunpack.c.h.b16 %v864
    %v961 = vunpack.c.l.b16 %v865
    %v962 = vunpack.c.h.b16 %v865
    %v963 = vunpack.c.l.b16 %v866
    %v964 = vunpack.c.h.b16 %v866
    %v965 = vunpack.c.l.b16 %v867
    %v966 = vunpack.c.h.b16 %v867
    %v967 = vunpack.c.l.b16 %v868
    %v968 = vunpack.c.h.b16 %v868
    %v969 = vunpack.c.l.b16 %v869
    %v970 = vunpack.c.h.b16 %v869
    %v971 = vunpack.c.l.b16 %v870
    %v972 = vunpack.c.h.b16 %v870
    %v973 = vunpack.c.l.b16 %v871
    %v974 = vunpack.c.h.b16 %v871
    %v975 = vunpack.c.l.b16 %v872
    %v976 = vunpack.c.h.b16 %v872
    %v977 = vunpack.c.l.b16 %v873
    %v978 = vunpack.c.h.b16 %v873
    %v979 = vunpack.c.l.b16 %v874
    %v980 = vunpack.c.h.b16 %v874
    %v981 = vunpack.c.l.b16 %v875
    %v982 = vunpack.c.h.b16 %v875
    %v983 = vunpack.c.l.b16 %v876
    %v984 = vunpack.c.h.b16 %v876
    %v985 = vpack.c.b16 %v923, %v921
    %v986 = vpack.c.b16 %v924, %v922
    %v987 = vpack.c.b16 %v927, %v925
    %v988 = vpack.c.b16 %v928, %v926
    %v989 = vpack.c.b16 %v931, %v929
    %v990 = vpack.c.b16 %v932, %v930
    %v991 = vpack.c.b16 %v935, %v933
    %v992 = vpack.c.b16 %v936, %v934
    %v993 = vpack.c.b16 %v939, %v937
    %v994 = vpack.c.b16 %v940, %v938
    %v995 = vpack.c.b16 %v943, %v941
    %v996 = vpack.c.b16 %v944, %v942
    %v997 = vpack.c.b16 %v947, %v945
    %v998 = vpack.c.b16 %v948, %v946
    %v999 = vpack.c.b16 %v951, %v949
    %v1000 = vpack.c.b16 %v952, %v950
    %v1001 = vpack.c.b16 %v955, %v953
    %v1002 = vpack.c.b16 %v956, %v954
    %v1003 = vpack.c.b16 %v959, %v957
    %v1004 = vpack.c.b16 %v960, %v958
    %v1005 = vpack.c.b16 %v963, %v961
    %v1006 = vpack.c.b16 %v964, %v962
    %v1007 = vpack.c.b16 %v967, %v965
    %v1008 = vpack.c.b16 %v968, %v966
    %v1009 = vpack.c.b16 %v971, %v969
    %v1010 = vpack.c.b16 %v972, %v970
    %v1011 = vpack.c.b16 %v975, %v973
    %v1012 = vpack.c.b16 %v976, %v974
    %v1013 = vpack.c.b16 %v979, %v977
    %v1014 = vpack.c.b16 %v980, %v978
    %v1015 = vpack.c.b16 %v983, %v981
    %v1016 = vpack.c.b16 %v984, %v982
    %1049 = vmatprep.subr.bf16.mxu0 %v1000
    %1050 = vmatpush1.bf16.msra.mxu0 %v999
    %1051 = vmatprep.subr.bf16.mxu0 %v998
    %1052 = vmatpush1.bf16.msra.mxu0 %v997
    %1053 = vmatprep.subr.bf16.mxu0 %v996
    %1054 = vmatpush1.bf16.msra.mxu0 %v995
    %1055 = vmatprep.subr.bf16.mxu0 %v994
    %1056 = vmatpush1.bf16.msra.mxu0 %v993
    %1057 = vmatprep.subr.bf16.mxu0 %v992
    %1058 = vmatpush1.bf16.msra.mxu0 %v991
    %1059 = vmatprep.subr.bf16.mxu0 %v990
    %1060 = vmatpush1.bf16.msra.mxu0 %v989
    %1061 = vmatprep.subr.bf16.mxu0 %v988
    %1062 = vmatpush1.bf16.msra.mxu0 %v987
    %1063 = vmatprep.subr.bf16.mxu0 %v986
    %1064 = vmatpush1.bf16.msra.mxu0 %v985
    %1065 = vmatprep.subr.bf16.mxu0 %v1016
    %1066 = vmatpush2.bf16.msra.mxu0 %v1015
    %1067 = vmatprep.subr.bf16.mxu0 %v1014
    %1068 = vmatpush2.bf16.msra.mxu0 %v1013
    %1069 = vmatprep.subr.bf16.mxu0 %v1012
    %1070 = vmatpush2.bf16.msra.mxu0 %v1011
    %1071 = vmatprep.subr.bf16.mxu0 %v1010
    %1072 = vmatpush2.bf16.msra.mxu0 %v1009
    %1073 = vmatprep.subr.bf16.mxu0 %v1008
    %1074 = vmatpush2.bf16.msra.mxu0 %v1007
    %1075 = vmatprep.subr.bf16.mxu0 %v1006
    %1076 = vmatpush2.bf16.msra.mxu0 %v1005
    %1077 = vmatprep.subr.bf16.mxu0 %v1004
    %1078 = vmatpush2.bf16.msra.mxu0 %v1003
    %1079 = vmatprep.subr.bf16.mxu0 %v1002
    %1080 = vmatpush2.bf16.msra.mxu0 %v1001
    %1081 = vmatprep.mubr.bf16.mxu0 %v844
    %1082 = vmatmul.mubr.bf16.gmra.mxu0 %v843
    %v1083 = vpop.f32.mrf.mxu0
    %v1084 = vadd.f32 %v882, %v1083
    %v1085 = vpop.f32.mrf.mxu0
    %v1086 = vadd.f32 %v886, %v1085
    %v1087 = vpop.f32.mrf.mxu0
    %v1088 = vpop.f32.mrf.mxu0
    %1089 = vdwg.mxu0
    %v1090 = vmax.f32 %v1084, 0.0
    %v1091 = vmax.f32 %v1086, 0.0
    %v1092 = vpack.c.bf16 %v1090, %v1090
    %v1093 = vpack.c.bf16 %v1091, %v1091
    %v1094 = vld [vmem:[#allocation16] sm:$0xf]
    %v1095 = vld [vmem:[#allocation16 + $0x4] sm:$0xf]
    %v1096 = vld [vmem:[#allocation16 + $0x8] sm:$0xf]
    %v1097 = vld [vmem:[#allocation16 + $0xc] sm:$0xf]
    %v1098 = vld [vmem:[#allocation16 + $0x10] sm:$0xf]
    %v1099 = vld [vmem:[#allocation16 + $0x14] sm:$0xf]
    %v1100 = vld [vmem:[#allocation16 + $0x18] sm:$0xf]
    %v1101 = vld [vmem:[#allocation16 + $0x1c] sm:$0xf]
    %v1102 = vld [vmem:[#allocation16 + $0x20] sm:$0xf]
    %v1103 = vld [vmem:[#allocation16 + $0x24] sm:$0xf]
    %v1104 = vld [vmem:[#allocation16 + $0x28] sm:$0xf]
    %v1105 = vld [vmem:[#allocation16 + $0x2c] sm:$0xf]
    %v1106 = vld [vmem:[#allocation16 + $0x30] sm:$0xf]
    %v1107 = vld [vmem:[#allocation16 + $0x34] sm:$0xf]
    %v1108 = vld [vmem:[#allocation16 + $0x38] sm:$0xf]
    %v1109 = vld [vmem:[#allocation16 + $0x3c] sm:$0xf]
    %v1110 = vld [vmem:[#allocation16 + $0x40] sm:$0xf]
    %v1111 = vld [vmem:[#allocation16 + $0x44] sm:$0xf]
    %v1112 = vld [vmem:[#allocation16 + $0x48] sm:$0xf]
    %v1113 = vld [vmem:[#allocation16 + $0x4c] sm:$0xf]
    %v1114 = vld [vmem:[#allocation16 + $0x50] sm:$0xf]
    %v1115 = vld [vmem:[#allocation16 + $0x54] sm:$0xf]
    %v1116 = vld [vmem:[#allocation16 + $0x58] sm:$0xf]
    %v1117 = vld [vmem:[#allocation16 + $0x5c] sm:$0xf]
    %v1118 = vld [vmem:[#allocation16 + $0x60] sm:$0xf]
    %v1119 = vld [vmem:[#allocation16 + $0x64] sm:$0xf]
    %v1120 = vld [vmem:[#allocation16 + $0x68] sm:$0xf]
    %v1121 = vld [vmem:[#allocation16 + $0x6c] sm:$0xf]
    %v1122 = vld [vmem:[#allocation16 + $0x70] sm:$0xf]
    %v1123 = vld [vmem:[#allocation16 + $0x74] sm:$0xf]
    %v1124 = vld [vmem:[#allocation16 + $0x78] sm:$0xf]
    %v1125 = vld [vmem:[#allocation16 + $0x7c] sm:$0xf]
    %v1126 = vld [vmem:[%s14] sm:$0x1]
    %v1128 = vlaneseq
    %v1129 = vshrl.u32 %v1128, 7
    %v1130 = vsub.s32 0, %v1129
    %v1131 = vrot.slane %v1126, %v1130
    %v1165 = vunpack.c.l.b16 %v1094
    %v1166 = vunpack.c.l.b16 %v1095
    %v1167 = vunpack.c.l.b16 %v1096
    %v1168 = vunpack.c.l.b16 %v1097
    %v1169 = vunpack.c.l.b16 %v1098
    %v1170 = vunpack.c.l.b16 %v1099
    %v1171 = vunpack.c.l.b16 %v1100
    %v1172 = vunpack.c.l.b16 %v1101
    %v1173 = vunpack.c.l.b16 %v1102
    %v1174 = vunpack.c.l.b16 %v1103
    %v1175 = vunpack.c.l.b16 %v1104
    %v1176 = vunpack.c.l.b16 %v1105
    %v1177 = vunpack.c.l.b16 %v1106
    %v1178 = vunpack.c.l.b16 %v1107
    %v1179 = vunpack.c.l.b16 %v1108
    %v1180 = vunpack.c.l.b16 %v1109
    %v1181 = vunpack.c.l.b16 %v1110
    %v1182 = vunpack.c.l.b16 %v1111
    %v1183 = vunpack.c.l.b16 %v1112
    %v1184 = vunpack.c.l.b16 %v1113
    %v1185 = vunpack.c.l.b16 %v1114
    %v1186 = vunpack.c.l.b16 %v1115
    %v1187 = vunpack.c.l.b16 %v1116
    %v1188 = vunpack.c.l.b16 %v1117
    %v1189 = vunpack.c.l.b16 %v1118
    %v1190 = vunpack.c.l.b16 %v1119
    %v1191 = vunpack.c.l.b16 %v1120
    %v1192 = vunpack.c.l.b16 %v1121
    %v1193 = vunpack.c.l.b16 %v1122
    %v1194 = vunpack.c.l.b16 %v1123
    %v1195 = vunpack.c.l.b16 %v1124
    %v1196 = vunpack.c.l.b16 %v1125
    %v1197 = vpack.c.b16 %v1166, %v1165
    %v1198 = vpack.c.b16 %v1168, %v1167
    %v1199 = vpack.c.b16 %v1170, %v1169
    %v1200 = vpack.c.b16 %v1172, %v1171
    %v1201 = vpack.c.b16 %v1174, %v1173
    %v1202 = vpack.c.b16 %v1176, %v1175
    %v1203 = vpack.c.b16 %v1178, %v1177
    %v1204 = vpack.c.b16 %v1180, %v1179
    %v1205 = vpack.c.b16 %v1182, %v1181
    %v1206 = vpack.c.b16 %v1184, %v1183
    %v1207 = vpack.c.b16 %v1186, %v1185
    %v1208 = vpack.c.b16 %v1188, %v1187
    %v1209 = vpack.c.b16 %v1190, %v1189
    %v1210 = vpack.c.b16 %v1192, %v1191
    %v1211 = vpack.c.b16 %v1194, %v1193
    %v1212 = vpack.c.b16 %v1196, %v1195
    %1229 = vmatprep.subr.bf16.mxu0 0
    %1230 = vmatpush1.bf16.msra.mxu0 %v1204
    %1231 = vmatprep.subr.bf16.mxu0 0
    %1232 = vmatpush1.bf16.msra.mxu0 %v1203
    %1233 = vmatprep.subr.bf16.mxu0 0
    %1234 = vmatpush1.bf16.msra.mxu0 %v1202
    %1235 = vmatprep.subr.bf16.mxu0 0
    %1236 = vmatpush1.bf16.msra.mxu0 %v1201
    %1237 = vmatprep.subr.bf16.mxu0 0
    %1238 = vmatpush1.bf16.msra.mxu0 %v1200
    %1239 = vmatprep.subr.bf16.mxu0 0
    %1240 = vmatpush1.bf16.msra.mxu0 %v1199
    %1241 = vmatprep.subr.bf16.mxu0 0
    %1242 = vmatpush1.bf16.msra.mxu0 %v1198
    %1243 = vmatprep.subr.bf16.mxu0 0
    %1244 = vmatpush1.bf16.msra.mxu0 %v1197
    %1245 = vmatprep.subr.bf16.mxu0 0
    %1246 = vmatpush2.bf16.msra.mxu0 %v1212
    %1247 = vmatprep.subr.bf16.mxu0 0
    %1248 = vmatpush2.bf16.msra.mxu0 %v1211
    %1249 = vmatprep.subr.bf16.mxu0 0
    %1250 = vmatpush2.bf16.msra.mxu0 %v1210
    %1251 = vmatprep.subr.bf16.mxu0 0
    %1252 = vmatpush2.bf16.msra.mxu0 %v1209
    %1253 = vmatprep.subr.bf16.mxu0 0
    %1254 = vmatpush2.bf16.msra.mxu0 %v1208
    %1255 = vmatprep.subr.bf16.mxu0 0
    %1256 = vmatpush2.bf16.msra.mxu0 %v1207
    %1257 = vmatprep.subr.bf16.mxu0 0
    %1258 = vmatpush2.bf16.msra.mxu0 %v1206
    %1259 = vmatprep.subr.bf16.mxu0 0
    %1260 = vmatpush2.bf16.msra.mxu0 %v1205
    %1261 = vmatprep.mubr.bf16.mxu0 %v1093
    %1262 = vmatmul.mubr.bf16.gmra.mxu0 %v1092
    %v1263 = vpop.f32.mrf.mxu0
    %v1264 = vadd.f32 %v1131, %v1263
    %v1265 = vpop.f32.mrf.mxu0
    %v1266 = vpop.f32.mrf.mxu0
    %v1267 = vpop.f32.mrf.mxu0
    %1268 = vdwg.mxu0
    %v1269 = vlaneseq
    %v1270 = vshrl.u32 %v1269, 7
    %v1271 = vsub.s32 1, %v1270
    %v1272 = vrot.slane %v683, %v1271
    %v1273 = vmul.f32 %v675, %v1272
    %v1274 = vadd.f32 %v1264, %v1273
    %v1275 = vlaneseq
    %v1276 = vshrl.u32 %v1275, 7
    %v1277 = vsub.s32 2, %v1276
    %v1278 = vrot.slane %v683, %v1277
    %v1279 = vmul.f32 %v682, %v1278
    %v1280 = vadd.f32 %v1274, %v1279
    %1281 = vst [vmem:[#allocation17] sm:$0xff] %v1280
    // Predicated region
    $region98: #{tpu_custom_call.1} parent=1 // pred_check
      _
    $region99: #{tpu_custom_call.1} parent=1 // pred_check_branch
      %1283 = sbr.rel (0) target = $region101
    $region100: #{tpu_custom_call.1} parent=1 // pred_region
      %s1285 = ssub.s32 128, 128
      %1286 = vsyncadd [#allocation4], %s1285
      %s1288 = sshll.u32 [#allocation17], 4
      %s1289 = int_to_ptr.vmem [resolvable:$true] %s1288
      %1291 = dma.vmem_to_hbm [thread:$0]  %s1289, 128, %s15, [#allocation4]
    $region101: #{tpu_custom_call.1} parent=1 // pred_fallthru
      _
    // Predicated region
    $region102: #{tpu_custom_call.1} parent=1 // pred_check
      _
    $region103: #{tpu_custom_call.1} parent=1 // pred_check_branch
      %1293 = sbr.rel (0) target = $region105
    $region104: #{tpu_custom_call.1} parent=1 // pred_region
      %1294 = dma.done [#allocation4], 128
    $region105: #{tpu_custom_call.1} parent=1 // pred_fallthru
      _
    %1295 = vsyncpa [#allocation3], 1
    %1296 = vsyncpa [#allocation6], 1
    %1297 = vsyncpa [#allocation9], 1
    %1298 = vsyncpa [#allocation12], 1
    %1299 = vsyncpa [#allocation15], 1
    %1300 = vsyncpa [#allocation4], 1

</llo_original>
